<compile_context>
chip_gen: v7x
topology: tpu7x:2x2x1
jax: 0.10.0
libtpu: 0.0.40
codegen_flags: <defaults>
</compile_context>

<pallas_src>
import functools

import jax
import jax.numpy as jnp
from jax.experimental import pallas as pl
from jax.experimental.pallas import tpu as pltpu


def _layer_norm(x, gamma, beta, eps):
    # x: (S, D); gamma/beta: (1, D). Biased variance, matching torch.nn.LayerNorm.
    mu = jnp.mean(x, axis=-1, keepdims=True)
    xc = x - mu
    var = jnp.mean(xc * xc, axis=-1, keepdims=True)
    return xc * jax.lax.rsqrt(var + eps) * gamma + beta


def _encoder_layer_kernel(
    x_ref,                       # (1, S, D)   one batch element per grid step
    wqkv_ref, bqkv_ref,          # (D, 3D), (1, 3D)
    wo_ref, bo_ref,              # (D, D),  (1, D)
    w1_ref, b1_ref,              # (D, F),  (1, F)
    w2_ref, b2_ref,              # (F, D),  (1, D)
    g1_ref, be1_ref,             # (1, D),  (1, D)   LayerNorm1 affine
    g2_ref, be2_ref,             # (1, D),  (1, D)   LayerNorm2 affine
    o_ref,                       # (1, S, D)
    *, nhead, activation, eps):
    x = x_ref[0]                                     # (S, D)
    S, D = x.shape
    dh = D // nhead
    scale = 1.0 / (dh ** 0.5)

    # ---- multi-head self-attention ------------------------------------
    # One wide (S, D) @ (D, 3D) MXU matmul produces Q | K | V.
    qkv = jnp.dot(x, wqkv_ref[...], preferred_element_type=jnp.float32)
    qkv = qkv + bqkv_ref[...]
    q = qkv[:, 0 * D:1 * D] * scale
    k = qkv[:, 1 * D:2 * D]
    v = qkv[:, 2 * D:3 * D]
    wo = wo_ref[...]                                  # (D, D)

    # Per-head SDPA, folding each head's context directly into the output
    # projection (avoids a head-concat VMEM copy; identical FLOPs).
    attn = bo_ref[...] * jnp.ones((S, 1), jnp.float32)          # (S, D) init with bias
    for h in range(nhead):                            # static unroll; 128-aligned slices
        lo, hi = h * dh, (h + 1) * dh
        qh = q[:, lo:hi]
        kh = k[:, lo:hi]
        vh = v[:, lo:hi]
        scores = jnp.einsum("qd,kd->qk", qh, kh,
                            preferred_element_type=jnp.float32)  # (S, S)
        m = jnp.max(scores, axis=-1, keepdims=True)
        e = jnp.exp(scores - m)
        p = e * pl.reciprocal(jnp.sum(e, axis=-1, keepdims=True), approx=True)
        ctx_h = jnp.dot(p, vh, preferred_element_type=jnp.float32)   # (S, dh)
        attn = attn + jnp.dot(ctx_h, wo[lo:hi, :],
                              preferred_element_type=jnp.float32)    # (S, D)

    # ---- residual + LayerNorm1 (dropout1 = identity) -------------------
    h1 = _layer_norm(x + attn, g1_ref[...], be1_ref[...], eps)

    # ---- feed-forward: Linear1 -> act -> Linear2 (dropout = identity) ---
    f = jnp.dot(h1, w1_ref[...], preferred_element_type=jnp.float32) + b1_ref[...]
    if activation == "relu":
        f = jnp.maximum(f, 0.0)
    elif activation == "gelu":
        f = jax.nn.gelu(f, approximate=False)
    else:
        raise ValueError(f"unsupported activation: {activation}")
    f = jnp.dot(f, w2_ref[...], preferred_element_type=jnp.float32) + b2_ref[...]

    # ---- residual + LayerNorm2 (dropout2 = identity) --------------------
    o_ref[0] = _layer_norm(h1 + f, g2_ref[...], be2_ref[...], eps).astype(o_ref.dtype)


def transformer_encoder_layer_forward(src, params, *, nhead, activation="relu",
                                      eps=1e-5):
    """src: (B, S, D).  params hold weights pre-transposed for `x @ W` layout."""
    B, S, D = src.shape
    DFF = params["w1"].shape[1]
    assert D % nhead == 0

    kernel = functools.partial(_encoder_layer_kernel, nhead=nhead,
                               activation=activation, eps=eps)

    resident = lambda b: (0, 0)        # weights/biases: single block, stays in VMEM
    per_batch = lambda b: (b, 0, 0)    # activations: one batch element per grid step

    weight_elems = sum(int(v.size) for v in params.values())
    flops = B * S * (2 * D * 3 * D          # QKV projection
                     + 4 * S * D            # scores + probs @ V
                     + 2 * D * D            # output projection
                     + 4 * D * DFF)         # two FFN matmuls
    cost = pl.CostEstimate(
        flops=int(flops),
        transcendentals=int(B * nhead * S * S),              # softmax exp
        bytes_accessed=int(4 * (2 * B * S * D + weight_elems)),
    )

    return pl.pallas_call(
        kernel,
        out_shape=jax.ShapeDtypeStruct((B, S, D), src.dtype),
        grid=(B,),
        in_specs=[
            pl.BlockSpec((1, S, D), per_batch),
            pl.BlockSpec((D, 3 * D), resident),
            pl.BlockSpec((1, 3 * D), resident),
            pl.BlockSpec((D, D), resident),
            pl.BlockSpec((1, D), resident),
            pl.BlockSpec((D, DFF), resident),
            pl.BlockSpec((1, DFF), resident),
            pl.BlockSpec((DFF, D), resident),
            pl.BlockSpec((1, D), resident),
            pl.BlockSpec((1, D), resident),
            pl.BlockSpec((1, D), resident),
            pl.BlockSpec((1, D), resident),
            pl.BlockSpec((1, D), resident),
        ],
        out_specs=pl.BlockSpec((1, S, D), per_batch),
        compiler_params=pltpu.CompilerParams(
            dimension_semantics=("parallel",),       # megacore-shard batch axis
            vmem_limit_bytes=32 * 1024 * 1024,       # safe on v5e/v6e/v7x
        ),
        cost_estimate=cost,
    )(src,
      params["w_qkv"], params["b_qkv"],
      params["w_o"], params["b_o"],
      params["w1"], params["b1"],
      params["w2"], params["b2"],
      params["ln1_g"], params["ln1_b"],
      params["ln2_g"], params["ln2_b"])


def reference_forward(src, params, *, nhead, activation="relu", eps=1e-5):
    """Pure-JAX reference mirroring torch's TransformerEncoderLayer math."""
    hp = jax.lax.Precision.HIGHEST
    B, S, D = src.shape
    dh = D // nhead

    qkv = jnp.einsum("bsd,de->bse", src, params["w_qkv"], precision=hp) + params["b_qkv"]
    q, k, v = jnp.split(qkv, 3, axis=-1)
    q = q.reshape(B, S, nhead, dh).transpose(0, 2, 1, 3) * (dh ** -0.5)
    k = k.reshape(B, S, nhead, dh).transpose(0, 2, 1, 3)
    v = v.reshape(B, S, nhead, dh).transpose(0, 2, 1, 3)
    scores = jnp.einsum("bhqd,bhkd->bhqk", q, k, precision=hp)
    probs = jax.nn.softmax(scores, axis=-1)
    ctx = jnp.einsum("bhqk,bhkd->bhqd", probs, v, precision=hp)
    ctx = ctx.transpose(0, 2, 1, 3).reshape(B, S, D)
    attn = jnp.einsum("bsd,de->bse", ctx, params["w_o"], precision=hp) + params["b_o"]

    def ln(x, g, b):
        mu = x.mean(-1, keepdims=True)
        xc = x - mu
        var = (xc * xc).mean(-1, keepdims=True)
        return xc * jax.lax.rsqrt(var + eps) * g + b

    h1 = ln(src + attn, params["ln1_g"], params["ln1_b"])
    f = jnp.einsum("bsd,df->bsf", h1, params["w1"], precision=hp) + params["b1"]
    f = jnp.maximum(f, 0.0) if activation == "relu" else jax.nn.gelu(f, approximate=False)
    f = jnp.einsum("bsf,fd->bsd", f, params["w2"], precision=hp) + params["b2"]
    return ln(h1 + f, params["ln2_g"], params["ln2_b"])


if __name__ == "__main__":
    # Small but TPU-friendly shapes: d_model / head_dim / dim_feedforward are
    # multiples of 128 so every block is lane-dense.
    B, S, D, H, DFF = 2, 16, 256, 2, 512

    key = jax.random.PRNGKey(0)
    keys = jax.random.split(key, 13)
    src = jax.random.normal(keys[0], (B, S, D), dtype=jnp.float32)

    def unif(k, shape, fan_in):
        lim = 1.0 / (fan_in ** 0.5)
        return jax.random.uniform(k, shape, jnp.float32, -lim, lim)

    params = dict(
        w_qkv=unif(keys[1], (D, 3 * D), D),      # in_proj_weight.T
        b_qkv=unif(keys[2], (1, 3 * D), D),
        w_o=unif(keys[3], (D, D), D),            # out_proj.weight.T
        b_o=unif(keys[4], (1, D), D),
        w1=unif(keys[5], (D, DFF), D),           # linear1.weight.T
        b1=unif(keys[6], (1, DFF), D),
        w2=unif(keys[7], (DFF, D), DFF),         # linear2.weight.T
        b2=unif(keys[8], (1, D), DFF),
        ln1_g=1.0 + 0.1 * jax.random.normal(keys[9], (1, D), jnp.float32),
        ln1_b=0.1 * jax.random.normal(keys[10], (1, D), jnp.float32),
        ln2_g=1.0 + 0.1 * jax.random.normal(keys[11], (1, D), jnp.float32),
        ln2_b=0.1 * jax.random.normal(keys[12], (1, D), jnp.float32),
    )

    out = transformer_encoder_layer_forward(src, params, nhead=H, activation="relu")
    jax.block_until_ready(out)

    ref = reference_forward(src, params, nhead=H, activation="relu")
    assert out.shape == (B, S, D)
    # Tolerance covers MXU-pass / approx-reciprocal vs. HIGHEST-precision XLA.
    max_err = float(jnp.max(jnp.abs(out - ref)))
    assert jnp.allclose(out, ref, atol=2e-2, rtol=2e-2), f"max abs err = {max_err}"

    print("KERNEL_OK")
</pallas_src>

<mosaic_0001>
module attributes {stable_mosaic.version = 11 : i64} {
  func.func @_encoder_layer_kernel(%arg0: i32, %arg1: memref<1x16x256xf32, #tpu.memory_space<vmem>>, %arg2: memref<256x768xf32, #tpu.memory_space<vmem>>, %arg3: memref<1x768xf32, #tpu.memory_space<vmem>>, %arg4: memref<256x256xf32, #tpu.memory_space<vmem>>, %arg5: memref<1x256xf32, #tpu.memory_space<vmem>>, %arg6: memref<256x512xf32, #tpu.memory_space<vmem>>, %arg7: memref<1x512xf32, #tpu.memory_space<vmem>>, %arg8: memref<512x256xf32, #tpu.memory_space<vmem>>, %arg9: memref<1x256xf32, #tpu.memory_space<vmem>>, %arg10: memref<1x256xf32, #tpu.memory_space<vmem>>, %arg11: memref<1x256xf32, #tpu.memory_space<vmem>>, %arg12: memref<1x256xf32, #tpu.memory_space<vmem>>, %arg13: memref<1x256xf32, #tpu.memory_space<vmem>>, %arg14: memref<1x16x256xf32, #tpu.memory_space<vmem>>) attributes {dimension_semantics = [#tpu.dimension_semantics<parallel>], iteration_bounds = array<i64: 2>, scalar_prefetch = 0 : i64, scratch_operands = 0 : i64, tpu.core_type = #tpu.core_type<tc>, window_params = [{transform_indices = @transform_0, window_bounds = array<i64: 1, 16, 256>}, {pipeline_mode = #tpu.pipeline_mode<synchronous>, transform_indices = @transform_1, window_bounds = array<i64: 256, 768>}, {pipeline_mode = #tpu.pipeline_mode<synchronous>, transform_indices = @transform_2, window_bounds = array<i64: 1, 768>}, {pipeline_mode = #tpu.pipeline_mode<synchronous>, transform_indices = @transform_3, window_bounds = array<i64: 256, 256>}, {pipeline_mode = #tpu.pipeline_mode<synchronous>, transform_indices = @transform_4, window_bounds = array<i64: 1, 256>}, {pipeline_mode = #tpu.pipeline_mode<synchronous>, transform_indices = @transform_5, window_bounds = array<i64: 256, 512>}, {pipeline_mode = #tpu.pipeline_mode<synchronous>, transform_indices = @transform_6, window_bounds = array<i64: 1, 512>}, {pipeline_mode = #tpu.pipeline_mode<synchronous>, transform_indices = @transform_7, window_bounds = array<i64: 512, 256>}, {pipeline_mode = #tpu.pipeline_mode<synchronous>, transform_indices = @transform_8, window_bounds = array<i64: 1, 256>}, {pipeline_mode = #tpu.pipeline_mode<synchronous>, transform_indices = @transform_9, window_bounds = array<i64: 1, 256>}, {pipeline_mode = #tpu.pipeline_mode<synchronous>, transform_indices = @transform_10, window_bounds = array<i64: 1, 256>}, {pipeline_mode = #tpu.pipeline_mode<synchronous>, transform_indices = @transform_11, window_bounds = array<i64: 1, 256>}, {pipeline_mode = #tpu.pipeline_mode<synchronous>, transform_indices = @transform_12, window_bounds = array<i64: 1, 256>}, {transform_indices = @transform_13, window_bounds = array<i64: 1, 16, 256>}]} {
    %c0 = arith.constant 0 : index
    %c0_0 = arith.constant 0 : index
    %c0_1 = arith.constant 0 : index
    %0 = vector.load %arg1[%c0, %c0_0, %c0_1] : memref<1x16x256xf32, #tpu.memory_space<vmem>>, vector<1x16x256xf32>
    %1 = vector.shape_cast %0 : vector<1x16x256xf32> to vector<16x256xf32>
    %c0_2 = arith.constant 0 : index
    %c0_3 = arith.constant 0 : index
    %2 = vector.load %arg2[%c0_2, %c0_3] : memref<256x768xf32, #tpu.memory_space<vmem>>, vector<256x768xf32>
    %cst = arith.constant dense<0.000000e+00> : vector<16x768xf32>
    %3 = tpu.matmul %1, %2, %cst {dimension_numbers = #tpu.dot_dimension_numbers<[1], [0], [0], [1], [0, 0, 1, 1], [], []>} : vector<16x256xf32>, vector<256x768xf32>, vector<16x768xf32> -> vector<16x768xf32>
    %c0_4 = arith.constant 0 : index
    %c0_5 = arith.constant 0 : index
    %4 = vector.load %arg3[%c0_4, %c0_5] : memref<1x768xf32, #tpu.memory_space<vmem>>, vector<1x768xf32>
    %5 = vector.broadcast %4 : vector<1x768xf32> to vector<16x768xf32>
    %6 = arith.addf %3, %5 : vector<16x768xf32>
    %7 = vector.extract_strided_slice %6 {offsets = [0, 0], sizes = [16, 256], strides = [1, 1]} : vector<16x768xf32> to vector<16x256xf32>
    %cst_6 = arith.constant 0.0883883461 : f32
    %8 = vector.broadcast %cst_6 : f32 to vector<16x256xf32>
    %9 = arith.mulf %7, %8 : vector<16x256xf32>
    %10 = vector.extract_strided_slice %6 {offsets = [0, 256], sizes = [16, 256], strides = [1, 1]} : vector<16x768xf32> to vector<16x256xf32>
    %11 = vector.extract_strided_slice %6 {offsets = [0, 512], sizes = [16, 256], strides = [1, 1]} : vector<16x768xf32> to vector<16x256xf32>
    %c0_7 = arith.constant 0 : index
    %c0_8 = arith.constant 0 : index
    %12 = vector.load %arg4[%c0_7, %c0_8] : memref<256x256xf32, #tpu.memory_space<vmem>>, vector<256x256xf32>
    %c0_9 = arith.constant 0 : index
    %c0_10 = arith.constant 0 : index
    %13 = vector.load %arg5[%c0_9, %c0_10] : memref<1x256xf32, #tpu.memory_space<vmem>>, vector<1x256xf32>
    %cst_11 = arith.constant 1.000000e+00 : f32
    %14 = vector.broadcast %cst_11 : f32 to vector<16x1xf32>
    %15 = vector.broadcast %13 : vector<1x256xf32> to vector<16x256xf32>
    %16 = vector.broadcast %14 : vector<16x1xf32> to vector<16x256xf32>
    %17 = arith.mulf %15, %16 : vector<16x256xf32>
    %18 = vector.extract_strided_slice %9 {offsets = [0, 0], sizes = [16, 128], strides = [1, 1]} : vector<16x256xf32> to vector<16x128xf32>
    %19 = vector.extract_strided_slice %10 {offsets = [0, 0], sizes = [16, 128], strides = [1, 1]} : vector<16x256xf32> to vector<16x128xf32>
    %20 = vector.extract_strided_slice %11 {offsets = [0, 0], sizes = [16, 128], strides = [1, 1]} : vector<16x256xf32> to vector<16x128xf32>
    "tpu.trace_start"() <{level = 10 : i32, message = "qd,kd->qk"}> : () -> ()
    %cst_12 = arith.constant dense<0.000000e+00> : vector<16x16xf32>
    %21 = tpu.matmul %18, %19, %cst_12 {dimension_numbers = #tpu.dot_dimension_numbers<[1], [1], [0], [0], [0, 0, 1, 0], [], []>} : vector<16x128xf32>, vector<16x128xf32>, vector<16x16xf32> -> vector<16x16xf32>
    "tpu.trace_stop"() : () -> ()
    %cst_13 = arith.constant dense<0xFF800000> : vector<16xf32>
    %22 = vector.multi_reduction <maximumf>, %21, %cst_13 [1] : vector<16x16xf32> to vector<16xf32>
    %23 = vector.shape_cast %22 : vector<16xf32> to vector<16x1xf32>
    %24 = vector.broadcast %23 : vector<16x1xf32> to vector<16x16xf32>
    %25 = arith.subf %21, %24 : vector<16x16xf32>
    %26 = math.exp %25 : vector<16x16xf32>
    %cst_14 = arith.constant dense<0.000000e+00> : vector<16xf32>
    %27 = vector.multi_reduction <add>, %26, %cst_14 [1] : vector<16x16xf32> to vector<16xf32>
    %28 = vector.shape_cast %27 : vector<16xf32> to vector<16x1xf32>
    %29 = tpu.reciprocal %28 {approx = true} : vector<16x1xf32> -> vector<16x1xf32>
    %30 = vector.broadcast %29 : vector<16x1xf32> to vector<16x16xf32>
    %31 = arith.mulf %26, %30 : vector<16x16xf32>
    %cst_15 = arith.constant dense<0.000000e+00> : vector<16x128xf32>
    %32 = tpu.matmul %31, %20, %cst_15 {dimension_numbers = #tpu.dot_dimension_numbers<[1], [0], [0], [1], [0, 0, 1, 1], [], []>} : vector<16x16xf32>, vector<16x128xf32>, vector<16x128xf32> -> vector<16x128xf32>
    %33 = vector.extract_strided_slice %12 {offsets = [0, 0], sizes = [128, 256], strides = [1, 1]} : vector<256x256xf32> to vector<128x256xf32>
    %cst_16 = arith.constant dense<0.000000e+00> : vector<16x256xf32>
    %34 = tpu.matmul %32, %33, %cst_16 {dimension_numbers = #tpu.dot_dimension_numbers<[1], [0], [0], [1], [0, 0, 1, 1], [], []>} : vector<16x128xf32>, vector<128x256xf32>, vector<16x256xf32> -> vector<16x256xf32>
    %35 = arith.addf %17, %34 : vector<16x256xf32>
    %36 = vector.extract_strided_slice %9 {offsets = [0, 128], sizes = [16, 128], strides = [1, 1]} : vector<16x256xf32> to vector<16x128xf32>
    %37 = vector.extract_strided_slice %10 {offsets = [0, 128], sizes = [16, 128], strides = [1, 1]} : vector<16x256xf32> to vector<16x128xf32>
    %38 = vector.extract_strided_slice %11 {offsets = [0, 128], sizes = [16, 128], strides = [1, 1]} : vector<16x256xf32> to vector<16x128xf32>
    "tpu.trace_start"() <{level = 10 : i32, message = "qd,kd->qk"}> : () -> ()
    %cst_17 = arith.constant dense<0.000000e+00> : vector<16x16xf32>
    %39 = tpu.matmul %36, %37, %cst_17 {dimension_numbers = #tpu.dot_dimension_numbers<[1], [1], [0], [0], [0, 0, 1, 0], [], []>} : vector<16x128xf32>, vector<16x128xf32>, vector<16x16xf32> -> vector<16x16xf32>
    "tpu.trace_stop"() : () -> ()
    %cst_18 = arith.constant dense<0xFF800000> : vector<16xf32>
    %40 = vector.multi_reduction <maximumf>, %39, %cst_18 [1] : vector<16x16xf32> to vector<16xf32>
    %41 = vector.shape_cast %40 : vector<16xf32> to vector<16x1xf32>
    %42 = vector.broadcast %41 : vector<16x1xf32> to vector<16x16xf32>
    %43 = arith.subf %39, %42 : vector<16x16xf32>
    %44 = math.exp %43 : vector<16x16xf32>
    %cst_19 = arith.constant dense<0.000000e+00> : vector<16xf32>
    %45 = vector.multi_reduction <add>, %44, %cst_19 [1] : vector<16x16xf32> to vector<16xf32>
    %46 = vector.shape_cast %45 : vector<16xf32> to vector<16x1xf32>
    %47 = tpu.reciprocal %46 {approx = true} : vector<16x1xf32> -> vector<16x1xf32>
    %48 = vector.broadcast %47 : vector<16x1xf32> to vector<16x16xf32>
    %49 = arith.mulf %44, %48 : vector<16x16xf32>
    %cst_20 = arith.constant dense<0.000000e+00> : vector<16x128xf32>
    %50 = tpu.matmul %49, %38, %cst_20 {dimension_numbers = #tpu.dot_dimension_numbers<[1], [0], [0], [1], [0, 0, 1, 1], [], []>} : vector<16x16xf32>, vector<16x128xf32>, vector<16x128xf32> -> vector<16x128xf32>
    %51 = vector.extract_strided_slice %12 {offsets = [128, 0], sizes = [128, 256], strides = [1, 1]} : vector<256x256xf32> to vector<128x256xf32>
    %cst_21 = arith.constant dense<0.000000e+00> : vector<16x256xf32>
    %52 = tpu.matmul %50, %51, %cst_21 {dimension_numbers = #tpu.dot_dimension_numbers<[1], [0], [0], [1], [0, 0, 1, 1], [], []>} : vector<16x128xf32>, vector<128x256xf32>, vector<16x256xf32> -> vector<16x256xf32>
    %53 = arith.addf %35, %52 : vector<16x256xf32>
    %54 = arith.addf %1, %53 : vector<16x256xf32>
    %c0_22 = arith.constant 0 : index
    %c0_23 = arith.constant 0 : index
    %55 = vector.load %arg10[%c0_22, %c0_23] : memref<1x256xf32, #tpu.memory_space<vmem>>, vector<1x256xf32>
    %c0_24 = arith.constant 0 : index
    %c0_25 = arith.constant 0 : index
    %56 = vector.load %arg11[%c0_24, %c0_25] : memref<1x256xf32, #tpu.memory_space<vmem>>, vector<1x256xf32>
    %cst_26 = arith.constant dense<0.000000e+00> : vector<16xf32>
    %57 = vector.multi_reduction <add>, %54, %cst_26 [1] : vector<16x256xf32> to vector<16xf32>
    %58 = vector.shape_cast %57 : vector<16xf32> to vector<16x1xf32>
    %cst_27 = arith.constant 2.560000e+02 : f32
    %59 = vector.broadcast %cst_27 : f32 to vector<16x1xf32>
    %60 = arith.divf %58, %59 : vector<16x1xf32>
    %61 = vector.broadcast %60 : vector<16x1xf32> to vector<16x256xf32>
    %62 = arith.subf %54, %61 : vector<16x256xf32>
    %63 = arith.mulf %62, %62 : vector<16x256xf32>
    %cst_28 = arith.constant dense<0.000000e+00> : vector<16xf32>
    %64 = vector.multi_reduction <add>, %63, %cst_28 [1] : vector<16x256xf32> to vector<16xf32>
    %65 = vector.shape_cast %64 : vector<16xf32> to vector<16x1xf32>
    %cst_29 = arith.constant 2.560000e+02 : f32
    %66 = vector.broadcast %cst_29 : f32 to vector<16x1xf32>
    %67 = arith.divf %65, %66 : vector<16x1xf32>
    %cst_30 = arith.constant 9.99999974E-6 : f32
    %68 = vector.broadcast %cst_30 : f32 to vector<16x1xf32>
    %69 = arith.addf %67, %68 : vector<16x1xf32>
    %70 = math.rsqrt %69 : vector<16x1xf32>
    %71 = vector.broadcast %70 : vector<16x1xf32> to vector<16x256xf32>
    %72 = arith.mulf %62, %71 : vector<16x256xf32>
    %73 = vector.broadcast %55 : vector<1x256xf32> to vector<16x256xf32>
    %74 = arith.mulf %72, %73 : vector<16x256xf32>
    %75 = vector.broadcast %56 : vector<1x256xf32> to vector<16x256xf32>
    %76 = arith.addf %74, %75 : vector<16x256xf32>
    %c0_31 = arith.constant 0 : index
    %c0_32 = arith.constant 0 : index
    %77 = vector.load %arg6[%c0_31, %c0_32] : memref<256x512xf32, #tpu.memory_space<vmem>>, vector<256x512xf32>
    %cst_33 = arith.constant dense<0.000000e+00> : vector<16x512xf32>
    %78 = tpu.matmul %76, %77, %cst_33 {dimension_numbers = #tpu.dot_dimension_numbers<[1], [0], [0], [1], [0, 0, 1, 1], [], []>} : vector<16x256xf32>, vector<256x512xf32>, vector<16x512xf32> -> vector<16x512xf32>
    %c0_34 = arith.constant 0 : index
    %c0_35 = arith.constant 0 : index
    %79 = vector.load %arg7[%c0_34, %c0_35] : memref<1x512xf32, #tpu.memory_space<vmem>>, vector<1x512xf32>
    %80 = vector.broadcast %79 : vector<1x512xf32> to vector<16x512xf32>
    %81 = arith.addf %78, %80 : vector<16x512xf32>
    %cst_36 = arith.constant 0.000000e+00 : f32
    %82 = vector.broadcast %cst_36 : f32 to vector<16x512xf32>
    %83 = arith.maximumf %81, %82 : vector<16x512xf32>
    %c0_37 = arith.constant 0 : index
    %c0_38 = arith.constant 0 : index
    %84 = vector.load %arg8[%c0_37, %c0_38] : memref<512x256xf32, #tpu.memory_space<vmem>>, vector<512x256xf32>
    %cst_39 = arith.constant dense<0.000000e+00> : vector<16x256xf32>
    %85 = tpu.matmul %83, %84, %cst_39 {dimension_numbers = #tpu.dot_dimension_numbers<[1], [0], [0], [1], [0, 0, 1, 1], [], []>} : vector<16x512xf32>, vector<512x256xf32>, vector<16x256xf32> -> vector<16x256xf32>
    %c0_40 = arith.constant 0 : index
    %c0_41 = arith.constant 0 : index
    %86 = vector.load %arg9[%c0_40, %c0_41] : memref<1x256xf32, #tpu.memory_space<vmem>>, vector<1x256xf32>
    %87 = vector.broadcast %86 : vector<1x256xf32> to vector<16x256xf32>
    %88 = arith.addf %85, %87 : vector<16x256xf32>
    %89 = arith.addf %76, %88 : vector<16x256xf32>
    %c0_42 = arith.constant 0 : index
    %c0_43 = arith.constant 0 : index
    %90 = vector.load %arg12[%c0_42, %c0_43] : memref<1x256xf32, #tpu.memory_space<vmem>>, vector<1x256xf32>
    %c0_44 = arith.constant 0 : index
    %c0_45 = arith.constant 0 : index
    %91 = vector.load %arg13[%c0_44, %c0_45] : memref<1x256xf32, #tpu.memory_space<vmem>>, vector<1x256xf32>
    %cst_46 = arith.constant dense<0.000000e+00> : vector<16xf32>
    %92 = vector.multi_reduction <add>, %89, %cst_46 [1] : vector<16x256xf32> to vector<16xf32>
    %93 = vector.shape_cast %92 : vector<16xf32> to vector<16x1xf32>
    %cst_47 = arith.constant 2.560000e+02 : f32
    %94 = vector.broadcast %cst_47 : f32 to vector<16x1xf32>
    %95 = arith.divf %93, %94 : vector<16x1xf32>
    %96 = vector.broadcast %95 : vector<16x1xf32> to vector<16x256xf32>
    %97 = arith.subf %89, %96 : vector<16x256xf32>
    %98 = arith.mulf %97, %97 : vector<16x256xf32>
    %cst_48 = arith.constant dense<0.000000e+00> : vector<16xf32>
    %99 = vector.multi_reduction <add>, %98, %cst_48 [1] : vector<16x256xf32> to vector<16xf32>
    %100 = vector.shape_cast %99 : vector<16xf32> to vector<16x1xf32>
    %cst_49 = arith.constant 2.560000e+02 : f32
    %101 = vector.broadcast %cst_49 : f32 to vector<16x1xf32>
    %102 = arith.divf %100, %101 : vector<16x1xf32>
    %cst_50 = arith.constant 9.99999974E-6 : f32
    %103 = vector.broadcast %cst_50 : f32 to vector<16x1xf32>
    %104 = arith.addf %102, %103 : vector<16x1xf32>
    %105 = math.rsqrt %104 : vector<16x1xf32>
    %106 = vector.broadcast %105 : vector<16x1xf32> to vector<16x256xf32>
    %107 = arith.mulf %97, %106 : vector<16x256xf32>
    %108 = vector.broadcast %90 : vector<1x256xf32> to vector<16x256xf32>
    %109 = arith.mulf %107, %108 : vector<16x256xf32>
    %110 = vector.broadcast %91 : vector<1x256xf32> to vector<16x256xf32>
    %111 = arith.addf %109, %110 : vector<16x256xf32>
    %c0_51 = arith.constant 0 : index
    %c0_52 = arith.constant 0 : index
    %c0_53 = arith.constant 0 : index
    %112 = vector.load %arg14[%c0_51, %c0_52, %c0_53] : memref<1x16x256xf32, #tpu.memory_space<vmem>>, vector<1x16x256xf32>
    %113 = vector.shape_cast %112 : vector<1x16x256xf32> to vector<16x256xf32>
    %114 = vector.shape_cast %111 : vector<16x256xf32> to vector<1x16x256xf32>
    tpu.vector_store %arg14[%c0_51, %c0_52, %c0_53], %114 {strides = array<i32>} : memref<1x16x256xf32, #tpu.memory_space<vmem>>, vector<1x16x256xf32>,
    return
  }
  func.func @transform_0(%arg0: i32) -> (i32, i32, i32) {
    %c0_i32 = arith.constant 0 : i32
    %c0_i32_0 = arith.constant 0 : i32
    %c0_i32_1 = arith.constant 0 : i32
    return %arg0, %c0_i32, %c0_i32_0 : i32, i32, i32
  }
  func.func @transform_1(%arg0: i32) -> (i32, i32) {
    %c0_i32 = arith.constant 0 : i32
    %c0_i32_0 = arith.constant 0 : i32
    %c0_i32_1 = arith.constant 0 : i32
    return %c0_i32, %c0_i32_0 : i32, i32
  }
  func.func @transform_2(%arg0: i32) -> (i32, i32) {
    %c0_i32 = arith.constant 0 : i32
    %c0_i32_0 = arith.constant 0 : i32
    %c0_i32_1 = arith.constant 0 : i32
    return %c0_i32, %c0_i32_0 : i32, i32
  }
  func.func @transform_3(%arg0: i32) -> (i32, i32) {
    %c0_i32 = arith.constant 0 : i32
    %c0_i32_0 = arith.constant 0 : i32
    %c0_i32_1 = arith.constant 0 : i32
    return %c0_i32, %c0_i32_0 : i32, i32
  }
  func.func @transform_4(%arg0: i32) -> (i32, i32) {
    %c0_i32 = arith.constant 0 : i32
    %c0_i32_0 = arith.constant 0 : i32
    %c0_i32_1 = arith.constant 0 : i32
    return %c0_i32, %c0_i32_0 : i32, i32
  }
  func.func @transform_5(%arg0: i32) -> (i32, i32) {
    %c0_i32 = arith.constant 0 : i32
    %c0_i32_0 = arith.constant 0 : i32
    %c0_i32_1 = arith.constant 0 : i32
    return %c0_i32, %c0_i32_0 : i32, i32
  }
  func.func @transform_6(%arg0: i32) -> (i32, i32) {
    %c0_i32 = arith.constant 0 : i32
    %c0_i32_0 = arith.constant 0 : i32
    %c0_i32_1 = arith.constant 0 : i32
    return %c0_i32, %c0_i32_0 : i32, i32
  }
  func.func @transform_7(%arg0: i32) -> (i32, i32) {
    %c0_i32 = arith.constant 0 : i32
    %c0_i32_0 = arith.constant 0 : i32
    %c0_i32_1 = arith.constant 0 : i32
    return %c0_i32, %c0_i32_0 : i32, i32
  }
  func.func @transform_8(%arg0: i32) -> (i32, i32) {
    %c0_i32 = arith.constant 0 : i32
    %c0_i32_0 = arith.constant 0 : i32
    %c0_i32_1 = arith.constant 0 : i32
    return %c0_i32, %c0_i32_0 : i32, i32
  }
  func.func @transform_9(%arg0: i32) -> (i32, i32) {
    %c0_i32 = arith.constant 0 : i32
    %c0_i32_0 = arith.constant 0 : i32
    %c0_i32_1 = arith.constant 0 : i32
    return %c0_i32, %c0_i32_0 : i32, i32
  }
  func.func @transform_10(%arg0: i32) -> (i32, i32) {
    %c0_i32 = arith.constant 0 : i32
    %c0_i32_0 = arith.constant 0 : i32
    %c0_i32_1 = arith.constant 0 : i32
    return %c0_i32, %c0_i32_0 : i32, i32
  }
  func.func @transform_11(%arg0: i32) -> (i32, i32) {
    %c0_i32 = arith.constant 0 : i32
    %c0_i32_0 = arith.constant 0 : i32
    %c0_i32_1 = arith.constant 0 : i32
    return %c0_i32, %c0_i32_0 : i32, i32
  }
  func.func @transform_12(%arg0: i32) -> (i32, i32) {
    %c0_i32 = arith.constant 0 : i32
    %c0_i32_0 = arith.constant 0 : i32
    %c0_i32_1 = arith.constant 0 : i32
    return %c0_i32, %c0_i32_0 : i32, i32
  }
  func.func @transform_13(%arg0: i32) -> (i32, i32, i32) {
    %c0_i32 = arith.constant 0 : i32
    %c0_i32_0 = arith.constant 0 : i32
    %c0_i32_1 = arith.constant 0 : i32
    return %arg0, %c0_i32, %c0_i32_0 : i32, i32, i32
  }
}

</mosaic_0001>

<llo_original>
// kernel: tpu_custom_call.1
$region0: #{tpu_custom_call.1}
  #allocation0 [shape = 'u32[]', space=smem, size = 0x4, offset = 0x4, fixed_abs, tag = 'smem constant byte address 0x4 - core index']
  #allocation1 [shape = 'u32[144,128]{1,0:T(1,128)}', space=vmem, size = 0x12000, scoped, tag = 'internal scratch']
  %s0 = inlined_call_operand.hbm [shape: f32[2,16,256], index: 0, kind: input, shape index: {}]
  %s1 = inlined_call_operand.hbm [shape: f32[256,768], index: 1, kind: input, shape index: {}]
  %s2 = inlined_call_operand.vmem [shape: f32[1,768], index: 2, kind: input, shape index: {}]
  %s3 = inlined_call_operand.hbm [shape: f32[256,256], index: 3, kind: input, shape index: {}]
  %s4 = inlined_call_operand.vmem [shape: f32[1,256], index: 4, kind: input, shape index: {}]
  %s5 = inlined_call_operand.hbm [shape: f32[256,512], index: 5, kind: input, shape index: {}]
  %s6 = inlined_call_operand.vmem [shape: f32[1,512], index: 6, kind: input, shape index: {}]
  %s7 = inlined_call_operand.hbm [shape: f32[512,256], index: 7, kind: input, shape index: {}]
  %s8 = inlined_call_operand.vmem [shape: f32[1,256], index: 8, kind: input, shape index: {}]
  %s9 = inlined_call_operand.vmem [shape: f32[1,256], index: 9, kind: input, shape index: {}]
  %s10 = inlined_call_operand.vmem [shape: f32[1,256], index: 10, kind: input, shape index: {}]
  %s11 = inlined_call_operand.vmem [shape: f32[1,256], index: 11, kind: input, shape index: {}]
  %s12 = inlined_call_operand.vmem [shape: f32[1,256], index: 12, kind: input, shape index: {}]
  %s13 = inlined_call_operand.hbm [shape: f32[2,16,256], index: 13, kind: output, shape index: {}]
  %s14 = sld [smem:[#allocation0]]
  $region105: #{tpu_custom_call.1} parent=0
    _
  %s16 = ssub.s32 1, %s14
  %s17 = scalar_select 0, %s16, %s14
  $region1: #{tpu_custom_call.1} parent=0
    #allocation2 [shape = 'u8[32768]{0}', space=vmem, size = 0x8000, scoped, tag = 'input window, operand 0']
    #allocation3 [shape = 's32[2]{0}', space=sflag, size = 0x8, scoped, tag = 'scoped memory for tpu_custom_call.1']
    #allocation4 [shape = 's32[2]{0}', space=sflag, size = 0x8, scoped, tag = 'scoped memory for tpu_custom_call.1']
    #allocation5 [shape = 'u8[786432]{0}', space=vmem, size = 0xc0000, scoped, tag = 'input window, operand 1, single buffered']
    #allocation6 [shape = 's32[1]{0}', space=sflag, size = 0x4, scoped, tag = 'scoped memory for tpu_custom_call.1']
    #allocation7 [shape = 'u8[262144]{0}', space=vmem, size = 0x40000, scoped, tag = 'input window, operand 3, single buffered']
    #allocation8 [shape = 'u8[524288]{0}', space=vmem, size = 0x80000, scoped, tag = 'input window, operand 5, single buffered']
    #allocation9 [shape = 's32[1]{0}', space=sflag, size = 0x4, scoped, tag = 'scoped memory for tpu_custom_call.1']
    #allocation10 [shape = 'u8[524288]{0}', space=vmem, size = 0x80000, scoped, tag = 'input window, operand 7, single buffered']
    #allocation11 [shape = 'u8[32768]{0}', space=vmem, size = 0x8000, scoped, tag = 'output window, operand 0']
    %18 = vsyncpa [#allocation3], 0
    %s19 = scalar_lea.sflag [#allocation3], 1
    %20 = vsyncpa %s19, 0
    %21 = vsyncpa [#allocation6], 0
    %22 = vsyncpa [#allocation9], 0
    %23 = vsyncpa [#allocation4], 0
    %s24 = scalar_lea.sflag [#allocation4], 1
    %25 = vsyncpa %s24, 0
    loop: start=0, step=1, limit=4
    $region2: #{tpu_custom_call.1} parent=1 // loop_pre_header
      _
    $region3: #{tpu_custom_call.1} parent=1 // loop_header
      %s27 = sphi 0, %s31
      %p28 = scmp.ge.s32.totalorder %s27, 4
      %s37 = sphi 0, %s39
      %s40 = sphi 0, %s37
      %s41 = sphi 0, %s40
      %s57 = sphi 0, %s41
      %s61 = sphi 0, %s61
      %s63 = sphi 0, %s61
      %s64 = sphi 0, %s63
      %s78 = sphi 0, %s64
      %s82 = sphi 0, %s82
      %s84 = sphi 0, %s82
      %s85 = sphi 0, %s84
      %s99 = sphi 0, %s85
      %s103 = sphi 0, %s103
      %s105 = sphi 0, %s103
      %s106 = sphi 0, %s105
      %s120 = sphi 0, %s106
      %s124 = sphi 0, %s124
      %s126 = sphi 0, %s124
      %s127 = sphi 0, %s126
      %s141 = sphi 0, %s127
      %s145 = sphi 0, %s145
      %s147 = sphi 0, %s145
      %s148 = sphi 0, %s147
      %s162 = sphi 0, %s148
      %s166 = sphi 0, %s166
      %s168 = sphi 0, %s166
      %s169 = sphi 0, %s168
      %s183 = sphi 0, %s169
      %s187 = sphi 0, %s187
      %s189 = sphi 0, %s187
      %s190 = sphi 0, %s189
      %s204 = sphi 0, %s190
      %s208 = sphi 0, %s208
      %s210 = sphi 0, %s208
      %s211 = sphi 0, %s210
      %s225 = sphi 0, %s211
      %s229 = sphi 0, %s229
      %s231 = sphi 0, %s229
      %s232 = sphi 0, %s231
      %s246 = sphi 0, %s232
      %s250 = sphi 0, %s250
      %s252 = sphi 0, %s250
      %s253 = sphi 0, %s252
      %s267 = sphi 0, %s253
      %s271 = sphi 0, %s271
      %s273 = sphi 0, %s271
      %s274 = sphi 0, %s273
      %s288 = sphi 0, %s274
      %s292 = sphi 0, %s292
      %s294 = sphi 0, %s292
      %s295 = sphi 0, %s294
      %s309 = sphi 0, %s295
      %s315 = sphi 0, %s317
      %s318 = sphi 0, %s315
      %s319 = sphi 0, %s318
      %s335 = sphi 0, %s319
    $region4: #{tpu_custom_call.1} parent=1 // loop_header_branch
      %30 = sbr.rel (%p28) target = $region8
    $region5: #{tpu_custom_call.1} parent=1 // loop_body
      %s32 = ssub.s32 %s27, 1
      %s33 = ssub.s32 %s27, 2
      %s34 = sadd.s32 %s27, 1
      %s35 = ssub.s32 %s27, %s34
      %p36 = scmp.eq.s32.totalorder %s35, 0
      %s38 = sadd.s32 %s37, 1
      %s39 = scalar_select %p36, %s37, %s38
      %p42 = pneg %p36
      %p43 = scmp.eq.s32.totalorder %s27, 1
      %p44 = por %p42, %p43
      %p45 = scmp.ne.s32.totalorder %s37, %s40
      %p46 = scmp.eq.s32.totalorder %s27, 0
      %p47 = por %p45, %p46
      %p48 = scmp.ne.s32.totalorder %s37, %s40
      %p49 = scmp.eq.s32.totalorder %s32, 1
      %p50 = por %p48, %p49
      %p51 = scmp.ne.s32.totalorder %s40, %s41
      %p52 = scmp.eq.s32.totalorder %s32, 0
      %p53 = por %p51, %p52
      %p54 = scmp.ne.s32.totalorder %s40, %s41
      %p55 = scmp.eq.s32.totalorder %s33, 1
      %p56 = por %p54, %p55
      %p58 = scmp.ne.s32.totalorder %s41, %s57
      %p59 = scmp.eq.s32.totalorder %s33, 0
      %p60 = por %p58, %p59
      %s62 = sadd.s32 %s61, 1
      %p65 = scmp.eq.s32.totalorder %s27, 1
      %p66 = scmp.ne.s32.totalorder %s61, %s63
      %p67 = scmp.eq.s32.totalorder %s27, 0
      %p68 = por %p66, %p67
      %p69 = scmp.ne.s32.totalorder %s61, %s63
      %p70 = scmp.eq.s32.totalorder %s32, 1
      %p71 = por %p69, %p70
      %p72 = scmp.ne.s32.totalorder %s63, %s64
      %p73 = scmp.eq.s32.totalorder %s32, 0
      %p74 = por %p72, %p73
      %p75 = scmp.ne.s32.totalorder %s63, %s64
      %p76 = scmp.eq.s32.totalorder %s33, 1
      %p77 = por %p75, %p76
      %p79 = scmp.ne.s32.totalorder %s64, %s78
      %p80 = scmp.eq.s32.totalorder %s33, 0
      %p81 = por %p79, %p80
      %s83 = sadd.s32 %s82, 1
      %p86 = scmp.eq.s32.totalorder %s27, 1
      %p87 = scmp.ne.s32.totalorder %s82, %s84
      %p88 = scmp.eq.s32.totalorder %s27, 0
      %p89 = por %p87, %p88
      %p90 = scmp.ne.s32.totalorder %s82, %s84
      %p91 = scmp.eq.s32.totalorder %s32, 1
      %p92 = por %p90, %p91
      %p93 = scmp.ne.s32.totalorder %s84, %s85
      %p94 = scmp.eq.s32.totalorder %s32, 0
      %p95 = por %p93, %p94
      %p96 = scmp.ne.s32.totalorder %s84, %s85
      %p97 = scmp.eq.s32.totalorder %s33, 1
      %p98 = por %p96, %p97
      %p100 = scmp.ne.s32.totalorder %s85, %s99
      %p101 = scmp.eq.s32.totalorder %s33, 0
      %p102 = por %p100, %p101
      %s104 = sadd.s32 %s103, 1
      %p107 = scmp.eq.s32.totalorder %s27, 1
      %p108 = scmp.ne.s32.totalorder %s103, %s105
      %p109 = scmp.eq.s32.totalorder %s27, 0
      %p110 = por %p108, %p109
      %p111 = scmp.ne.s32.totalorder %s103, %s105
      %p112 = scmp.eq.s32.totalorder %s32, 1
      %p113 = por %p111, %p112
      %p114 = scmp.ne.s32.totalorder %s105, %s106
      %p115 = scmp.eq.s32.totalorder %s32, 0
      %p116 = por %p114, %p115
      %p117 = scmp.ne.s32.totalorder %s105, %s106
      %p118 = scmp.eq.s32.totalorder %s33, 1
      %p119 = por %p117, %p118
      %p121 = scmp.ne.s32.totalorder %s106, %s120
      %p122 = scmp.eq.s32.totalorder %s33, 0
      %p123 = por %p121, %p122
      %s125 = sadd.s32 %s124, 1
      %p128 = scmp.eq.s32.totalorder %s27, 1
      %p129 = scmp.ne.s32.totalorder %s124, %s126
      %p130 = scmp.eq.s32.totalorder %s27, 0
      %p131 = por %p129, %p130
      %p132 = scmp.ne.s32.totalorder %s124, %s126
      %p133 = scmp.eq.s32.totalorder %s32, 1
      %p134 = por %p132, %p133
      %p135 = scmp.ne.s32.totalorder %s126, %s127
      %p136 = scmp.eq.s32.totalorder %s32, 0
      %p137 = por %p135, %p136
      %p138 = scmp.ne.s32.totalorder %s126, %s127
      %p139 = scmp.eq.s32.totalorder %s33, 1
      %p140 = por %p138, %p139
      %p142 = scmp.ne.s32.totalorder %s127, %s141
      %p143 = scmp.eq.s32.totalorder %s33, 0
      %p144 = por %p142, %p143
      %s146 = sadd.s32 %s145, 1
      %p149 = scmp.eq.s32.totalorder %s27, 1
      %p150 = scmp.ne.s32.totalorder %s145, %s147
      %p151 = scmp.eq.s32.totalorder %s27, 0
      %p152 = por %p150, %p151
      %p153 = scmp.ne.s32.totalorder %s145, %s147
      %p154 = scmp.eq.s32.totalorder %s32, 1
      %p155 = por %p153, %p154
      %p156 = scmp.ne.s32.totalorder %s147, %s148
      %p157 = scmp.eq.s32.totalorder %s32, 0
      %p158 = por %p156, %p157
      %p159 = scmp.ne.s32.totalorder %s147, %s148
      %p160 = scmp.eq.s32.totalorder %s33, 1
      %p161 = por %p159, %p160
      %p163 = scmp.ne.s32.totalorder %s148, %s162
      %p164 = scmp.eq.s32.totalorder %s33, 0
      %p165 = por %p163, %p164
      %s167 = sadd.s32 %s166, 1
      %p170 = scmp.eq.s32.totalorder %s27, 1
      %p171 = scmp.ne.s32.totalorder %s166, %s168
      %p172 = scmp.eq.s32.totalorder %s27, 0
      %p173 = por %p171, %p172
      %p174 = scmp.ne.s32.totalorder %s166, %s168
      %p175 = scmp.eq.s32.totalorder %s32, 1
      %p176 = por %p174, %p175
      %p177 = scmp.ne.s32.totalorder %s168, %s169
      %p178 = scmp.eq.s32.totalorder %s32, 0
      %p179 = por %p177, %p178
      %p180 = scmp.ne.s32.totalorder %s168, %s169
      %p181 = scmp.eq.s32.totalorder %s33, 1
      %p182 = por %p180, %p181
      %p184 = scmp.ne.s32.totalorder %s169, %s183
      %p185 = scmp.eq.s32.totalorder %s33, 0
      %p186 = por %p184, %p185
      %s188 = sadd.s32 %s187, 1
      %p191 = scmp.eq.s32.totalorder %s27, 1
      %p192 = scmp.ne.s32.totalorder %s187, %s189
      %p193 = scmp.eq.s32.totalorder %s27, 0
      %p194 = por %p192, %p193
      %p195 = scmp.ne.s32.totalorder %s187, %s189
      %p196 = scmp.eq.s32.totalorder %s32, 1
      %p197 = por %p195, %p196
      %p198 = scmp.ne.s32.totalorder %s189, %s190
      %p199 = scmp.eq.s32.totalorder %s32, 0
      %p200 = por %p198, %p199
      %p201 = scmp.ne.s32.totalorder %s189, %s190
      %p202 = scmp.eq.s32.totalorder %s33, 1
      %p203 = por %p201, %p202
      %p205 = scmp.ne.s32.totalorder %s190, %s204
      %p206 = scmp.eq.s32.totalorder %s33, 0
      %p207 = por %p205, %p206
      %s209 = sadd.s32 %s208, 1
      %p212 = scmp.eq.s32.totalorder %s27, 1
      %p213 = scmp.ne.s32.totalorder %s208, %s210
      %p214 = scmp.eq.s32.totalorder %s27, 0
      %p215 = por %p213, %p214
      %p216 = scmp.ne.s32.totalorder %s208, %s210
      %p217 = scmp.eq.s32.totalorder %s32, 1
      %p218 = por %p216, %p217
      %p219 = scmp.ne.s32.totalorder %s210, %s211
      %p220 = scmp.eq.s32.totalorder %s32, 0
      %p221 = por %p219, %p220
      %p222 = scmp.ne.s32.totalorder %s210, %s211
      %p223 = scmp.eq.s32.totalorder %s33, 1
      %p224 = por %p222, %p223
      %p226 = scmp.ne.s32.totalorder %s211, %s225
      %p227 = scmp.eq.s32.totalorder %s33, 0
      %p228 = por %p226, %p227
      %s230 = sadd.s32 %s229, 1
      %p233 = scmp.eq.s32.totalorder %s27, 1
      %p234 = scmp.ne.s32.totalorder %s229, %s231
      %p235 = scmp.eq.s32.totalorder %s27, 0
      %p236 = por %p234, %p235
      %p237 = scmp.ne.s32.totalorder %s229, %s231
      %p238 = scmp.eq.s32.totalorder %s32, 1
      %p239 = por %p237, %p238
      %p240 = scmp.ne.s32.totalorder %s231, %s232
      %p241 = scmp.eq.s32.totalorder %s32, 0
      %p242 = por %p240, %p241
      %p243 = scmp.ne.s32.totalorder %s231, %s232
      %p244 = scmp.eq.s32.totalorder %s33, 1
      %p245 = por %p243, %p244
      %p247 = scmp.ne.s32.totalorder %s232, %s246
      %p248 = scmp.eq.s32.totalorder %s33, 0
      %p249 = por %p247, %p248
      %s251 = sadd.s32 %s250, 1
      %p254 = scmp.eq.s32.totalorder %s27, 1
      %p255 = scmp.ne.s32.totalorder %s250, %s252
      %p256 = scmp.eq.s32.totalorder %s27, 0
      %p257 = por %p255, %p256
      %p258 = scmp.ne.s32.totalorder %s250, %s252
      %p259 = scmp.eq.s32.totalorder %s32, 1
      %p260 = por %p258, %p259
      %p261 = scmp.ne.s32.totalorder %s252, %s253
      %p262 = scmp.eq.s32.totalorder %s32, 0
      %p263 = por %p261, %p262
      %p264 = scmp.ne.s32.totalorder %s252, %s253
      %p265 = scmp.eq.s32.totalorder %s33, 1
      %p266 = por %p264, %p265
      %p268 = scmp.ne.s32.totalorder %s253, %s267
      %p269 = scmp.eq.s32.totalorder %s33, 0
      %p270 = por %p268, %p269
      %s272 = sadd.s32 %s271, 1
      %p275 = scmp.eq.s32.totalorder %s27, 1
      %p276 = scmp.ne.s32.totalorder %s271, %s273
      %p277 = scmp.eq.s32.totalorder %s27, 0
      %p278 = por %p276, %p277
      %p279 = scmp.ne.s32.totalorder %s271, %s273
      %p280 = scmp.eq.s32.totalorder %s32, 1
      %p281 = por %p279, %p280
      %p282 = scmp.ne.s32.totalorder %s273, %s274
      %p283 = scmp.eq.s32.totalorder %s32, 0
      %p284 = por %p282, %p283
      %p285 = scmp.ne.s32.totalorder %s273, %s274
      %p286 = scmp.eq.s32.totalorder %s33, 1
      %p287 = por %p285, %p286
      %p289 = scmp.ne.s32.totalorder %s274, %s288
      %p290 = scmp.eq.s32.totalorder %s33, 0
      %p291 = por %p289, %p290
      %s293 = sadd.s32 %s292, 1
      %p296 = scmp.eq.s32.totalorder %s27, 1
      %p297 = scmp.ne.s32.totalorder %s292, %s294
      %p298 = scmp.eq.s32.totalorder %s27, 0
      %p299 = por %p297, %p298
      %p300 = scmp.ne.s32.totalorder %s292, %s294
      %p301 = scmp.eq.s32.totalorder %s32, 1
      %p302 = por %p300, %p301
      %p303 = scmp.ne.s32.totalorder %s294, %s295
      %p304 = scmp.eq.s32.totalorder %s32, 0
      %p305 = por %p303, %p304
      %p306 = scmp.ne.s32.totalorder %s294, %s295
      %p307 = scmp.eq.s32.totalorder %s33, 1
      %p308 = por %p306, %p307
      %p310 = scmp.ne.s32.totalorder %s295, %s309
      %p311 = scmp.eq.s32.totalorder %s33, 0
      %p312 = por %p310, %p311
      %s313 = ssub.s32 %s27, %s34
      %p314 = scmp.eq.s32.totalorder %s313, 0
      %s316 = sadd.s32 %s315, 1
      %s317 = scalar_select %p314, %s315, %s316
      %p320 = pneg %p314
      %p321 = scmp.eq.s32.totalorder %s27, 1
      %p322 = por %p320, %p321
      %p323 = scmp.ne.s32.totalorder %s315, %s318
      %p324 = scmp.eq.s32.totalorder %s27, 0
      %p325 = por %p323, %p324
      %p326 = scmp.ne.s32.totalorder %s315, %s318
      %p327 = scmp.eq.s32.totalorder %s32, 1
      %p328 = por %p326, %p327
      %p329 = scmp.ne.s32.totalorder %s318, %s319
      %p330 = scmp.eq.s32.totalorder %s32, 0
      %p331 = por %p329, %p330
      %p332 = scmp.ne.s32.totalorder %s318, %s319
      %p333 = scmp.eq.s32.totalorder %s33, 1
      %p334 = por %p332, %p333
      %p336 = scmp.ne.s32.totalorder %s319, %s335
      %p337 = scmp.eq.s32.totalorder %s33, 0
      %p338 = por %p336, %p337
      %p339 = scmp.le.s32.totalorder 1, %s27
      %p340 = scmp.lt.s32.totalorder %s27, 3
      %p341 = pnand %p339, %p340
      %p342 = pneg %p341
      // Predicated region
      $region9: #{tpu_custom_call.1} parent=5 // pred_check
        _
      $region10: #{tpu_custom_call.1} parent=5 // pred_check_branch
        %344 = sbr.rel (%p341) target = $region12
      $region11: #{tpu_custom_call.1} parent=5 // pred_region
        %s345 = ssub.s32 %s27, 1
        // Predicated region
        $region13: #{tpu_custom_call.1} parent=11 // pred_check
          %p346 = pneg %p74
        $region14: #{tpu_custom_call.1} parent=11 // pred_check_branch
          %348 = sbr.rel (%p346) target = $region16
        $region15: #{tpu_custom_call.1} parent=11 // pred_region
          %s350 = ssub.s32 24576, 24576
          %351 = vsyncadd [#allocation6], %s350
          %s352 = sshll.u32 [#allocation5], 4
          %s353 = int_to_ptr.vmem [resolvable:$true] %s352
          %358 = dma.hbm_to_vmem [thread:$0]  %s1, 24576, %s353, [#allocation6], 768, 768, 48
        $region16: #{tpu_custom_call.1} parent=11 // pred_fallthru
          _
        // Predicated region
        $region17: #{tpu_custom_call.1} parent=11 // pred_check
          %p359 = pneg %p95
        $region18: #{tpu_custom_call.1} parent=11 // pred_check_branch
          %361 = sbr.rel (%p359) target = $region20
        $region19: #{tpu_custom_call.1} parent=11 // pred_region
          _
        $region20: #{tpu_custom_call.1} parent=11 // pred_fallthru
          _
        // Predicated region
        $region21: #{tpu_custom_call.1} parent=11 // pred_check
          %p362 = pneg %p116
        $region22: #{tpu_custom_call.1} parent=11 // pred_check_branch
          %364 = sbr.rel (%p362) target = $region24
        $region23: #{tpu_custom_call.1} parent=11 // pred_region
          %s366 = ssub.s32 8192, 8192
          %367 = vsyncadd [#allocation6], %s366
          %s368 = sshll.u32 [#allocation7], 4
          %s369 = int_to_ptr.vmem [resolvable:$true] %s368
          %374 = dma.hbm_to_vmem [thread:$0]  %s3, 8192, %s369, [#allocation6], 256, 256, 16
        $region24: #{tpu_custom_call.1} parent=11 // pred_fallthru
          _
        // Predicated region
        $region25: #{tpu_custom_call.1} parent=11 // pred_check
          %p375 = pneg %p137
        $region26: #{tpu_custom_call.1} parent=11 // pred_check_branch
          %377 = sbr.rel (%p375) target = $region28
        $region27: #{tpu_custom_call.1} parent=11 // pred_region
          _
        $region28: #{tpu_custom_call.1} parent=11 // pred_fallthru
          _
        // Predicated region
        $region29: #{tpu_custom_call.1} parent=11 // pred_check
          %p378 = pneg %p158
        $region30: #{tpu_custom_call.1} parent=11 // pred_check_branch
          %380 = sbr.rel (%p378) target = $region32
        $region31: #{tpu_custom_call.1} parent=11 // pred_region
          %s382 = ssub.s32 16384, 16384
          %383 = vsyncadd [#allocation9], %s382
          %s384 = sshll.u32 [#allocation8], 4
          %s385 = int_to_ptr.vmem [resolvable:$true] %s384
          %390 = dma.hbm_to_vmem [thread:$0]  %s5, 16384, %s385, [#allocation9], 512, 512, 32
        $region32: #{tpu_custom_call.1} parent=11 // pred_fallthru
          _
        // Predicated region
        $region33: #{tpu_custom_call.1} parent=11 // pred_check
          %p391 = pneg %p179
        $region34: #{tpu_custom_call.1} parent=11 // pred_check_branch
          %393 = sbr.rel (%p391) target = $region36
        $region35: #{tpu_custom_call.1} parent=11 // pred_region
          _
        $region36: #{tpu_custom_call.1} parent=11 // pred_fallthru
          _
        // Predicated region
        $region37: #{tpu_custom_call.1} parent=11 // pred_check
          %p394 = pneg %p200
        $region38: #{tpu_custom_call.1} parent=11 // pred_check_branch
          %396 = sbr.rel (%p394) target = $region40
        $region39: #{tpu_custom_call.1} parent=11 // pred_region
          %s398 = ssub.s32 16384, 16384
          %399 = vsyncadd [#allocation9], %s398
          %s400 = sshll.u32 [#allocation10], 4
          %s401 = int_to_ptr.vmem [resolvable:$true] %s400
          %406 = dma.hbm_to_vmem [thread:$0]  %s7, 16384, %s401, [#allocation9], 256, 256, 16
        $region40: #{tpu_custom_call.1} parent=11 // pred_fallthru
          _
        // Predicated region
        $region41: #{tpu_custom_call.1} parent=11 // pred_check
          %p407 = pneg %p221
        $region42: #{tpu_custom_call.1} parent=11 // pred_check_branch
          %409 = sbr.rel (%p407) target = $region44
        $region43: #{tpu_custom_call.1} parent=11 // pred_region
          _
        $region44: #{tpu_custom_call.1} parent=11 // pred_fallthru
          _
        // Predicated region
        $region45: #{tpu_custom_call.1} parent=11 // pred_check
          %p410 = pneg %p242
        $region46: #{tpu_custom_call.1} parent=11 // pred_check_branch
          %412 = sbr.rel (%p410) target = $region48
        $region47: #{tpu_custom_call.1} parent=11 // pred_region
          _
        $region48: #{tpu_custom_call.1} parent=11 // pred_fallthru
          _
        // Predicated region
        $region49: #{tpu_custom_call.1} parent=11 // pred_check
          %p413 = pneg %p263
        $region50: #{tpu_custom_call.1} parent=11 // pred_check_branch
          %415 = sbr.rel (%p413) target = $region52
        $region51: #{tpu_custom_call.1} parent=11 // pred_region
          _
        $region52: #{tpu_custom_call.1} parent=11 // pred_fallthru
          _
        // Predicated region
        $region53: #{tpu_custom_call.1} parent=11 // pred_check
          %p416 = pneg %p284
        $region54: #{tpu_custom_call.1} parent=11 // pred_check_branch
          %418 = sbr.rel (%p416) target = $region56
        $region55: #{tpu_custom_call.1} parent=11 // pred_region
          _
        $region56: #{tpu_custom_call.1} parent=11 // pred_fallthru
          _
        // Predicated region
        $region57: #{tpu_custom_call.1} parent=11 // pred_check
          %p419 = pneg %p305
        $region58: #{tpu_custom_call.1} parent=11 // pred_check_branch
          %421 = sbr.rel (%p419) target = $region60
        $region59: #{tpu_custom_call.1} parent=11 // pred_region
          _
        $region60: #{tpu_custom_call.1} parent=11 // pred_fallthru
          _
      $region12: #{tpu_custom_call.1} parent=5 // pred_fallthru
        _
      %p422 = scmp.lt.s32.totalorder %s27, 2
      // Predicated region
      $region61: #{tpu_custom_call.1} parent=5 // pred_check
        %p423 = pneg %p422
      $region62: #{tpu_custom_call.1} parent=5 // pred_check_branch
        %425 = sbr.rel (%p423) target = $region64
      $region63: #{tpu_custom_call.1} parent=5 // pred_region
        // Predicated region
        $region65: #{tpu_custom_call.1} parent=63 // pred_check
          %p426 = pneg %p47
        $region66: #{tpu_custom_call.1} parent=63 // pred_check_branch
          %428 = sbr.rel (%p426) target = $region68
        $region67: #{tpu_custom_call.1} parent=63 // pred_region
          %s429 = sand.u32 %s37, 1
          %s430 = scalar_lea.sflag [#allocation3], %s429
          %s431 = sand.u32 %s37, 1
          %s432 = smul.addr %s431, 32
          %s433 = scalar_lea.vmem [#allocation2], %s432
          %s435 = ssub.s32 512, 512
          %436 = vsyncadd %s430, %s435
          %s437 = smul.addr %s27, 4
          %s438 = smul.addr %s437, 128
          %s439 = scalar_lea.hbm %s0, %s438
          %s440 = sshll.u32 %s433, 4
          %s441 = int_to_ptr.vmem [resolvable:$true] %s440
          %446 = dma.hbm_to_vmem [thread:$0]  %s439, 512, %s441, %s430, 256, 256, 16
        $region68: #{tpu_custom_call.1} parent=63 // pred_fallthru
          _
      $region64: #{tpu_custom_call.1} parent=5 // pred_fallthru
        _
      %p447 = scmp.le.s32.totalorder 1, %s27
      %p448 = scmp.lt.s32.totalorder %s27, 3
      %p449 = pnand %p447, %p448
      %p450 = pneg %p449
      // Predicated region
      $region69: #{tpu_custom_call.1} parent=5 // pred_check
        _
      $region70: #{tpu_custom_call.1} parent=5 // pred_check_branch
        %452 = sbr.rel (%p449) target = $region72
      $region71: #{tpu_custom_call.1} parent=5 // pred_region
        %s453 = ssub.s32 %s27, 1
        %s454 = sand.u32 %s40, 1
        %s455 = scalar_lea.sflag [#allocation3], %s454
        %s456 = sand.u32 %s40, 1
        %s457 = smul.addr %s456, 32
        %s458 = scalar_lea.vmem [#allocation2], %s457
        // Predicated region
        $region73: #{tpu_custom_call.1} parent=71 // pred_check
          %p459 = pneg %p53
        $region74: #{tpu_custom_call.1} parent=71 // pred_check_branch
          %461 = sbr.rel (%p459) target = $region76
        $region75: #{tpu_custom_call.1} parent=71 // pred_region
          %462 = dma.done %s455, 512
        $region76: #{tpu_custom_call.1} parent=71 // pred_fallthru
          _
        // Predicated region
        $region77: #{tpu_custom_call.1} parent=71 // pred_check
          %p463 = pneg %p74
        $region78: #{tpu_custom_call.1} parent=71 // pred_check_branch
          %465 = sbr.rel (%p463) target = $region80
        $region79: #{tpu_custom_call.1} parent=71 // pred_region
          %466 = dma.done [#allocation6], 24576
        $region80: #{tpu_custom_call.1} parent=71 // pred_fallthru
          _
        // Predicated region
        $region81: #{tpu_custom_call.1} parent=71 // pred_check
          %p467 = pneg %p116
        $region82: #{tpu_custom_call.1} parent=71 // pred_check_branch
          %469 = sbr.rel (%p467) target = $region84
        $region83: #{tpu_custom_call.1} parent=71 // pred_region
          %470 = dma.done [#allocation6], 8192
        $region84: #{tpu_custom_call.1} parent=71 // pred_fallthru
          _
        // Predicated region
        $region85: #{tpu_custom_call.1} parent=71 // pred_check
          %p471 = pneg %p158
        $region86: #{tpu_custom_call.1} parent=71 // pred_check_branch
          %473 = sbr.rel (%p471) target = $region88
        $region87: #{tpu_custom_call.1} parent=71 // pred_region
          %474 = dma.done [#allocation9], 16384
        $region88: #{tpu_custom_call.1} parent=71 // pred_fallthru
          _
        // Predicated region
        $region89: #{tpu_custom_call.1} parent=71 // pred_check
          %p475 = pneg %p200
        $region90: #{tpu_custom_call.1} parent=71 // pred_check_branch
          %477 = sbr.rel (%p475) target = $region92
        $region91: #{tpu_custom_call.1} parent=71 // pred_region
          %478 = dma.done [#allocation9], 16384
        $region92: #{tpu_custom_call.1} parent=71 // pred_fallthru
          _
        %s479 = sand.u32 %s40, 1
        %s480 = scalar_lea.sflag [#allocation3], %s479
        %s481 = sand.u32 %s40, 1
        %s482 = smul.addr %s481, 32
        %s483 = scalar_lea.vmem [#allocation2], %s482
        %p484 = pneg %p53
        %p485 = pneg %p50
        %p486 = pneg %p74
        %p487 = pneg %p71
        %p488 = pneg %p95
        %p489 = pneg %p92
        %p490 = pneg %p116
        %p491 = pneg %p113
        %p492 = pneg %p137
        %p493 = pneg %p134
        %p494 = pneg %p158
        %p495 = pneg %p155
        %p496 = pneg %p179
        %p497 = pneg %p176
        %p498 = pneg %p200
        %p499 = pneg %p197
        %p500 = pneg %p221
        %p501 = pneg %p218
        %p502 = pneg %p242
        %p503 = pneg %p239
        %p504 = pneg %p263
        %p505 = pneg %p260
        %p506 = pneg %p284
        %p507 = pneg %p281
        %p508 = pneg %p305
        %p509 = pneg %p302
        %p510 = pneg %p331
        %p511 = pneg %p328
        %s512 = sand.u32 %s318, 1
        %s513 = scalar_lea.sflag [#allocation4], %s512
        %s514 = sand.u32 %s318, 1
        %s515 = smul.addr %s514, 32
        %s516 = scalar_lea.vmem [#allocation11], %s515
        %v517 = vld [vmem:[%s458] sm:$0xff]
        %v518 = vld [vmem:[%s458 + $0x8] sm:$0xff]
        %v519 = vld [vmem:[%s458 + $0x10] sm:$0xff]
        %v520 = vld [vmem:[%s458 + $0x18] sm:$0xff]
        %v521 = vld [vmem:[#allocation5] sm:$0xff]
        %v522 = vld [vmem:[#allocation5 + $0x8] sm:$0xff]
        %v523 = vld [vmem:[#allocation5 + $0x10] sm:$0xff]
        %v524 = vld [vmem:[#allocation5 + $0x18] sm:$0xff]
        %v525 = vld [vmem:[#allocation5 + $0x20] sm:$0xff]
        %v526 = vld [vmem:[#allocation5 + $0x28] sm:$0xff]
        %v527 = vld [vmem:[#allocation5 + $0x30] sm:$0xff]
        %v528 = vld [vmem:[#allocation5 + $0x38] sm:$0xff]
        %v529 = vld [vmem:[#allocation5 + $0x40] sm:$0xff]
        %v530 = vld [vmem:[#allocation5 + $0x48] sm:$0xff]
        %v531 = vld [vmem:[#allocation5 + $0x50] sm:$0xff]
        %v532 = vld [vmem:[#allocation5 + $0x58] sm:$0xff]
        %v533 = vld [vmem:[#allocation5 + $0x60] sm:$0xff]
        %v534 = vld [vmem:[#allocation5 + $0x68] sm:$0xff]
        %v535 = vld [vmem:[#allocation5 + $0x70] sm:$0xff]
        %v536 = vld [vmem:[#allocation5 + $0x78] sm:$0xff]
        %v537 = vld [vmem:[#allocation5 + $0x80] sm:$0xff]
        %v538 = vld [vmem:[#allocation5 + $0x88] sm:$0xff]
        %v539 = vld [vmem:[#allocation5 + $0x90] sm:$0xff]
        %v540 = vld [vmem:[#allocation5 + $0x98] sm:$0xff]
        %v541 = vld [vmem:[#allocation5 + $0xa0] sm:$0xff]
        %v542 = vld [vmem:[#allocation5 + $0xa8] sm:$0xff]
        %v543 = vld [vmem:[#allocation5 + $0xb0] sm:$0xff]
        %v544 = vld [vmem:[#allocation5 + $0xb8] sm:$0xff]
        %v545 = vld [vmem:[#allocation5 + $0xc0] sm:$0xff]
        %v546 = vld [vmem:[#allocation5 + $0xc8] sm:$0xff]
        %v547 = vld [vmem:[#allocation5 + $0xd0] sm:$0xff]
        %v548 = vld [vmem:[#allocation5 + $0xd8] sm:$0xff]
        %v549 = vld [vmem:[#allocation5 + $0xe0] sm:$0xff]
        %v550 = vld [vmem:[#allocation5 + $0xe8] sm:$0xff]
        %v551 = vld [vmem:[#allocation5 + $0xf0] sm:$0xff]
        %v552 = vld [vmem:[#allocation5 + $0xf8] sm:$0xff]
        %v553 = vld [vmem:[#allocation5 + $0x100] sm:$0xff]
        %v554 = vld [vmem:[#allocation5 + $0x108] sm:$0xff]
        %v555 = vld [vmem:[#allocation5 + $0x110] sm:$0xff]
        %v556 = vld [vmem:[#allocation5 + $0x118] sm:$0xff]
        %v557 = vld [vmem:[#allocation5 + $0x120] sm:$0xff]
        %v558 = vld [vmem:[#allocation5 + $0x128] sm:$0xff]
        %v559 = vld [vmem:[#allocation5 + $0x130] sm:$0xff]
        %v560 = vld [vmem:[#allocation5 + $0x138] sm:$0xff]
        %v561 = vld [vmem:[#allocation5 + $0x140] sm:$0xff]
        %v562 = vld [vmem:[#allocation5 + $0x148] sm:$0xff]
        %v563 = vld [vmem:[#allocation5 + $0x150] sm:$0xff]
        %v564 = vld [vmem:[#allocation5 + $0x158] sm:$0xff]
        %v565 = vld [vmem:[#allocation5 + $0x160] sm:$0xff]
        %v566 = vld [vmem:[#allocation5 + $0x168] sm:$0xff]
        %v567 = vld [vmem:[#allocation5 + $0x170] sm:$0xff]
        %v568 = vld [vmem:[#allocation5 + $0x178] sm:$0xff]
        %v569 = vld [vmem:[#allocation5 + $0x180] sm:$0xff]
        %v570 = vld [vmem:[#allocation5 + $0x188] sm:$0xff]
        %v571 = vld [vmem:[#allocation5 + $0x190] sm:$0xff]
        %v572 = vld [vmem:[#allocation5 + $0x198] sm:$0xff]
        %v573 = vld [vmem:[#allocation5 + $0x1a0] sm:$0xff]
        %v574 = vld [vmem:[#allocation5 + $0x1a8] sm:$0xff]
        %v575 = vld [vmem:[#allocation5 + $0x1b0] sm:$0xff]
        %v576 = vld [vmem:[#allocation5 + $0x1b8] sm:$0xff]
        %v577 = vld [vmem:[#allocation5 + $0x1c0] sm:$0xff]
        %v578 = vld [vmem:[#allocation5 + $0x1c8] sm:$0xff]
        %v579 = vld [vmem:[#allocation5 + $0x1d0] sm:$0xff]
        %v580 = vld [vmem:[#allocation5 + $0x1d8] sm:$0xff]
        %v581 = vld [vmem:[#allocation5 + $0x1e0] sm:$0xff]
        %v582 = vld [vmem:[#allocation5 + $0x1e8] sm:$0xff]
        %v583 = vld [vmem:[#allocation5 + $0x1f0] sm:$0xff]
        %v584 = vld [vmem:[#allocation5 + $0x1f8] sm:$0xff]
        %v585 = vld [vmem:[#allocation5 + $0x200] sm:$0xff]
        %v586 = vld [vmem:[#allocation5 + $0x208] sm:$0xff]
        %v587 = vld [vmem:[#allocation5 + $0x210] sm:$0xff]
        %v588 = vld [vmem:[#allocation5 + $0x218] sm:$0xff]
        %v589 = vld [vmem:[#allocation5 + $0x220] sm:$0xff]
        %v590 = vld [vmem:[#allocation5 + $0x228] sm:$0xff]
        %v591 = vld [vmem:[#allocation5 + $0x230] sm:$0xff]
        %v592 = vld [vmem:[#allocation5 + $0x238] sm:$0xff]
        %v593 = vld [vmem:[#allocation5 + $0x240] sm:$0xff]
        %v594 = vld [vmem:[#allocation5 + $0x248] sm:$0xff]
        %v595 = vld [vmem:[#allocation5 + $0x250] sm:$0xff]
        %v596 = vld [vmem:[#allocation5 + $0x258] sm:$0xff]
        %v597 = vld [vmem:[#allocation5 + $0x260] sm:$0xff]
        %v598 = vld [vmem:[#allocation5 + $0x268] sm:$0xff]
        %v599 = vld [vmem:[#allocation5 + $0x270] sm:$0xff]
        %v600 = vld [vmem:[#allocation5 + $0x278] sm:$0xff]
        %v601 = vld [vmem:[#allocation5 + $0x280] sm:$0xff]
        %v602 = vld [vmem:[#allocation5 + $0x288] sm:$0xff]
        %v603 = vld [vmem:[#allocation5 + $0x290] sm:$0xff]
        %v604 = vld [vmem:[#allocation5 + $0x298] sm:$0xff]
        %v605 = vld [vmem:[#allocation5 + $0x2a0] sm:$0xff]
        %v606 = vld [vmem:[#allocation5 + $0x2a8] sm:$0xff]
        %v607 = vld [vmem:[#allocation5 + $0x2b0] sm:$0xff]
        %v608 = vld [vmem:[#allocation5 + $0x2b8] sm:$0xff]
        %v609 = vld [vmem:[#allocation5 + $0x2c0] sm:$0xff]
        %v610 = vld [vmem:[#allocation5 + $0x2c8] sm:$0xff]
        %v611 = vld [vmem:[#allocation5 + $0x2d0] sm:$0xff]
        %v612 = vld [vmem:[#allocation5 + $0x2d8] sm:$0xff]
        %v613 = vld [vmem:[#allocation5 + $0x2e0] sm:$0xff]
        %v614 = vld [vmem:[#allocation5 + $0x2e8] sm:$0xff]
        %v615 = vld [vmem:[#allocation5 + $0x2f0] sm:$0xff]
        %v616 = vld [vmem:[#allocation5 + $0x2f8] sm:$0xff]
        %v617 = vld [vmem:[#allocation5 + $0x300] sm:$0xff]
        %v618 = vld [vmem:[#allocation5 + $0x308] sm:$0xff]
        %v619 = vld [vmem:[#allocation5 + $0x310] sm:$0xff]
        %v620 = vld [vmem:[#allocation5 + $0x318] sm:$0xff]
        %v621 = vld [vmem:[#allocation5 + $0x320] sm:$0xff]
        %v622 = vld [vmem:[#allocation5 + $0x328] sm:$0xff]
        %v623 = vld [vmem:[#allocation5 + $0x330] sm:$0xff]
        %v624 = vld [vmem:[#allocation5 + $0x338] sm:$0xff]
        %v625 = vld [vmem:[#allocation5 + $0x340] sm:$0xff]
        %v626 = vld [vmem:[#allocation5 + $0x348] sm:$0xff]
        %v627 = vld [vmem:[#allocation5 + $0x350] sm:$0xff]
        %v628 = vld [vmem:[#allocation5 + $0x358] sm:$0xff]
        %v629 = vld [vmem:[#allocation5 + $0x360] sm:$0xff]
        %v630 = vld [vmem:[#allocation5 + $0x368] sm:$0xff]
        %v631 = vld [vmem:[#allocation5 + $0x370] sm:$0xff]
        %v632 = vld [vmem:[#allocation5 + $0x378] sm:$0xff]
        %v633 = vld [vmem:[#allocation5 + $0x380] sm:$0xff]
        %v634 = vld [vmem:[#allocation5 + $0x388] sm:$0xff]
        %v635 = vld [vmem:[#allocation5 + $0x390] sm:$0xff]
        %v636 = vld [vmem:[#allocation5 + $0x398] sm:$0xff]
        %v637 = vld [vmem:[#allocation5 + $0x3a0] sm:$0xff]
        %v638 = vld [vmem:[#allocation5 + $0x3a8] sm:$0xff]
        %v639 = vld [vmem:[#allocation5 + $0x3b0] sm:$0xff]
        %v640 = vld [vmem:[#allocation5 + $0x3b8] sm:$0xff]
        %v641 = vld [vmem:[#allocation5 + $0x3c0] sm:$0xff]
        %v642 = vld [vmem:[#allocation5 + $0x3c8] sm:$0xff]
        %v643 = vld [vmem:[#allocation5 + $0x3d0] sm:$0xff]
        %v644 = vld [vmem:[#allocation5 + $0x3d8] sm:$0xff]
        %v645 = vld [vmem:[#allocation5 + $0x3e0] sm:$0xff]
        %v646 = vld [vmem:[#allocation5 + $0x3e8] sm:$0xff]
        %v647 = vld [vmem:[#allocation5 + $0x3f0] sm:$0xff]
        %v648 = vld [vmem:[#allocation5 + $0x3f8] sm:$0xff]
        %v649 = vld [vmem:[#allocation5 + $0x400] sm:$0xff]
        %v650 = vld [vmem:[#allocation5 + $0x408] sm:$0xff]
        %v651 = vld [vmem:[#allocation5 + $0x410] sm:$0xff]
        %v652 = vld [vmem:[#allocation5 + $0x418] sm:$0xff]
        %v653 = vld [vmem:[#allocation5 + $0x420] sm:$0xff]
        %v654 = vld [vmem:[#allocation5 + $0x428] sm:$0xff]
        %v655 = vld [vmem:[#allocation5 + $0x430] sm:$0xff]
        %v656 = vld [vmem:[#allocation5 + $0x438] sm:$0xff]
        %v657 = vld [vmem:[#allocation5 + $0x440] sm:$0xff]
        %v658 = vld [vmem:[#allocation5 + $0x448] sm:$0xff]
        %v659 = vld [vmem:[#allocation5 + $0x450] sm:$0xff]
        %v660 = vld [vmem:[#allocation5 + $0x458] sm:$0xff]
        %v661 = vld [vmem:[#allocation5 + $0x460] sm:$0xff]
        %v662 = vld [vmem:[#allocation5 + $0x468] sm:$0xff]
        %v663 = vld [vmem:[#allocation5 + $0x470] sm:$0xff]
        %v664 = vld [vmem:[#allocation5 + $0x478] sm:$0xff]
        %v665 = vld [vmem:[#allocation5 + $0x480] sm:$0xff]
        %v666 = vld [vmem:[#allocation5 + $0x488] sm:$0xff]
        %v667 = vld [vmem:[#allocation5 + $0x490] sm:$0xff]
        %v668 = vld [vmem:[#allocation5 + $0x498] sm:$0xff]
        %v669 = vld [vmem:[#allocation5 + $0x4a0] sm:$0xff]
        %v670 = vld [vmem:[#allocation5 + $0x4a8] sm:$0xff]
        %v671 = vld [vmem:[#allocation5 + $0x4b0] sm:$0xff]
        %v672 = vld [vmem:[#allocation5 + $0x4b8] sm:$0xff]
        %v673 = vld [vmem:[#allocation5 + $0x4c0] sm:$0xff]
        %v674 = vld [vmem:[#allocation5 + $0x4c8] sm:$0xff]
        %v675 = vld [vmem:[#allocation5 + $0x4d0] sm:$0xff]
        %v676 = vld [vmem:[#allocation5 + $0x4d8] sm:$0xff]
        %v677 = vld [vmem:[#allocation5 + $0x4e0] sm:$0xff]
        %v678 = vld [vmem:[#allocation5 + $0x4e8] sm:$0xff]
        %v679 = vld [vmem:[#allocation5 + $0x4f0] sm:$0xff]
        %v680 = vld [vmem:[#allocation5 + $0x4f8] sm:$0xff]
        %v681 = vld [vmem:[#allocation5 + $0x500] sm:$0xff]
        %v682 = vld [vmem:[#allocation5 + $0x508] sm:$0xff]
        %v683 = vld [vmem:[#allocation5 + $0x510] sm:$0xff]
        %v684 = vld [vmem:[#allocation5 + $0x518] sm:$0xff]
        %v685 = vld [vmem:[#allocation5 + $0x520] sm:$0xff]
        %v686 = vld [vmem:[#allocation5 + $0x528] sm:$0xff]
        %v687 = vld [vmem:[#allocation5 + $0x530] sm:$0xff]
        %v688 = vld [vmem:[#allocation5 + $0x538] sm:$0xff]
        %v689 = vld [vmem:[#allocation5 + $0x540] sm:$0xff]
        %v690 = vld [vmem:[#allocation5 + $0x548] sm:$0xff]
        %v691 = vld [vmem:[#allocation5 + $0x550] sm:$0xff]
        %v692 = vld [vmem:[#allocation5 + $0x558] sm:$0xff]
        %v693 = vld [vmem:[#allocation5 + $0x560] sm:$0xff]
        %v694 = vld [vmem:[#allocation5 + $0x568] sm:$0xff]
        %v695 = vld [vmem:[#allocation5 + $0x570] sm:$0xff]
        %v696 = vld [vmem:[#allocation5 + $0x578] sm:$0xff]
        %v697 = vld [vmem:[#allocation5 + $0x580] sm:$0xff]
        %v698 = vld [vmem:[#allocation5 + $0x588] sm:$0xff]
        %v699 = vld [vmem:[#allocation5 + $0x590] sm:$0xff]
        %v700 = vld [vmem:[#allocation5 + $0x598] sm:$0xff]
        %v701 = vld [vmem:[#allocation5 + $0x5a0] sm:$0xff]
        %v702 = vld [vmem:[#allocation5 + $0x5a8] sm:$0xff]
        %v703 = vld [vmem:[#allocation5 + $0x5b0] sm:$0xff]
        %v704 = vld [vmem:[#allocation5 + $0x5b8] sm:$0xff]
        %v705 = vld [vmem:[#allocation5 + $0x5c0] sm:$0xff]
        %v706 = vld [vmem:[#allocation5 + $0x5c8] sm:$0xff]
        %v707 = vld [vmem:[#allocation5 + $0x5d0] sm:$0xff]
        %v708 = vld [vmem:[#allocation5 + $0x5d8] sm:$0xff]
        %v709 = vld [vmem:[#allocation5 + $0x5e0] sm:$0xff]
        %v710 = vld [vmem:[#allocation5 + $0x5e8] sm:$0xff]
        %v711 = vld [vmem:[#allocation5 + $0x5f0] sm:$0xff]
        %v712 = vld [vmem:[#allocation5 + $0x5f8] sm:$0xff]
        %v713 = vld [vmem:[%s2] sm:$0x3f]
        %v715 = vlaneseq
        %v716 = vshrl.u32 %v715, 7
        %v717 = vsub.s32 0, %v716
        %v718 = vrot.slane %v713, %v717
        %v719 = vlaneseq
        %v720 = vshrl.u32 %v719, 7
        %v721 = vsub.s32 1, %v720
        %v722 = vrot.slane %v713, %v721
        %v723 = vlaneseq
        %v724 = vshrl.u32 %v723, 7
        %v725 = vsub.s32 2, %v724
        %v726 = vrot.slane %v713, %v725
        %v727 = vlaneseq
        %v728 = vshrl.u32 %v727, 7
        %v729 = vsub.s32 3, %v728
        %v730 = vrot.slane %v713, %v729
        %v731 = vlaneseq
        %v732 = vshrl.u32 %v731, 7
        %v733 = vsub.s32 4, %v732
        %v734 = vrot.slane %v713, %v733
        %v735 = vlaneseq
        %v736 = vshrl.u32 %v735, 7
        %v737 = vsub.s32 5, %v736
        %v738 = vrot.slane %v713, %v737
        %745 = vmatprep.subr.mxu0 %v522
        %746 = vmatpush1.msra.mxu0 %v521
        %747 = vmatprep.subr.mxu0 %v528
        %748 = vmatpush1.msra.mxu0 %v527
        %749 = vmatprep.subr.mxu0 %v534
        %750 = vmatpush1.msra.mxu0 %v533
        %751 = vmatprep.subr.mxu0 %v540
        %752 = vmatpush1.msra.mxu0 %v539
        %753 = vmatprep.subr.mxu0 %v546
        %754 = vmatpush1.msra.mxu0 %v545
        %755 = vmatprep.subr.mxu0 %v552
        %756 = vmatpush1.msra.mxu0 %v551
        %757 = vmatprep.subr.mxu0 %v558
        %758 = vmatpush1.msra.mxu0 %v557
        %759 = vmatprep.subr.mxu0 %v564
        %760 = vmatpush1.msra.mxu0 %v563
        %761 = vmatprep.subr.mxu0 %v570
        %762 = vmatpush1.msra.mxu0 %v569
        %763 = vmatprep.subr.mxu0 %v576
        %764 = vmatpush1.msra.mxu0 %v575
        %765 = vmatprep.subr.mxu0 %v582
        %766 = vmatpush1.msra.mxu0 %v581
        %767 = vmatprep.subr.mxu0 %v588
        %768 = vmatpush1.msra.mxu0 %v587
        %769 = vmatprep.subr.mxu0 %v594
        %770 = vmatpush1.msra.mxu0 %v593
        %771 = vmatprep.subr.mxu0 %v600
        %772 = vmatpush1.msra.mxu0 %v599
        %773 = vmatprep.subr.mxu0 %v606
        %774 = vmatpush1.msra.mxu0 %v605
        %775 = vmatprep.subr.mxu0 %v612
        %776 = vmatpush1.msra.mxu0 %v611
        %777 = vmatprep.subr.mxu0 %v618
        %778 = vmatpush1.msra.mxu0 %v617
        %779 = vmatprep.subr.mxu0 %v624
        %780 = vmatpush1.msra.mxu0 %v623
        %781 = vmatprep.subr.mxu0 %v630
        %782 = vmatpush1.msra.mxu0 %v629
        %783 = vmatprep.subr.mxu0 %v636
        %784 = vmatpush1.msra.mxu0 %v635
        %785 = vmatprep.subr.mxu0 %v642
        %786 = vmatpush1.msra.mxu0 %v641
        %787 = vmatprep.subr.mxu0 %v648
        %788 = vmatpush1.msra.mxu0 %v647
        %789 = vmatprep.subr.mxu0 %v654
        %790 = vmatpush1.msra.mxu0 %v653
        %791 = vmatprep.subr.mxu0 %v660
        %792 = vmatpush1.msra.mxu0 %v659
        %793 = vmatprep.subr.mxu0 %v666
        %794 = vmatpush1.msra.mxu0 %v665
        %795 = vmatprep.subr.mxu0 %v672
        %796 = vmatpush1.msra.mxu0 %v671
        %797 = vmatprep.subr.mxu0 %v678
        %798 = vmatpush1.msra.mxu0 %v677
        %799 = vmatprep.subr.mxu0 %v684
        %800 = vmatpush1.msra.mxu0 %v683
        %801 = vmatprep.subr.mxu0 %v690
        %802 = vmatpush1.msra.mxu0 %v689
        %803 = vmatprep.subr.mxu0 %v696
        %804 = vmatpush1.msra.mxu0 %v695
        %805 = vmatprep.subr.mxu0 %v702
        %806 = vmatpush1.msra.mxu0 %v701
        %807 = vmatprep.subr.mxu0 %v708
        %808 = vmatpush1.msra.mxu0 %v707
        %809 = vmatprep.mubr.f32.mxu0 %v518
        %810 = vmatmul.mubr.f32.gmra.mrb[0].mxu0 %v517
        %v811 = vpop.f32.mrb[0].mxu0
        %v812 = vadd.f32 %v718, %v811
        %v813 = vpop.f32.mrb[0].mxu0
        %v814 = vadd.f32 %v722, %v813
        %815 = vmatprep.mubr.f32.mxu0 %v520
        %816 = vmatmul.mubr.f32.gmra.mrb[0].mxu0 %v519
        %v817 = vpop.f32.mrb[0].mxu0
        %v818 = vadd.f32 %v718, %v817
        %v819 = vpop.f32.mrb[0].mxu0
        %v820 = vadd.f32 %v722, %v819
        %821 = vdwg.mxu0
        %822 = vmatprep.subr.mxu0 %v524
        %823 = vmatpush1.msra.mxu0 %v523
        %824 = vmatprep.subr.mxu0 %v530
        %825 = vmatpush1.msra.mxu0 %v529
        %826 = vmatprep.subr.mxu0 %v536
        %827 = vmatpush1.msra.mxu0 %v535
        %828 = vmatprep.subr.mxu0 %v542
        %829 = vmatpush1.msra.mxu0 %v541
        %830 = vmatprep.subr.mxu0 %v548
        %831 = vmatpush1.msra.mxu0 %v547
        %832 = vmatprep.subr.mxu0 %v554
        %833 = vmatpush1.msra.mxu0 %v553
        %834 = vmatprep.subr.mxu0 %v560
        %835 = vmatpush1.msra.mxu0 %v559
        %836 = vmatprep.subr.mxu0 %v566
        %837 = vmatpush1.msra.mxu0 %v565
        %838 = vmatprep.subr.mxu0 %v572
        %839 = vmatpush1.msra.mxu0 %v571
        %840 = vmatprep.subr.mxu0 %v578
        %841 = vmatpush1.msra.mxu0 %v577
        %842 = vmatprep.subr.mxu0 %v584
        %843 = vmatpush1.msra.mxu0 %v583
        %844 = vmatprep.subr.mxu0 %v590
        %845 = vmatpush1.msra.mxu0 %v589
        %846 = vmatprep.subr.mxu0 %v596
        %847 = vmatpush1.msra.mxu0 %v595
        %848 = vmatprep.subr.mxu0 %v602
        %849 = vmatpush1.msra.mxu0 %v601
        %850 = vmatprep.subr.mxu0 %v608
        %851 = vmatpush1.msra.mxu0 %v607
        %852 = vmatprep.subr.mxu0 %v614
        %853 = vmatpush1.msra.mxu0 %v613
        %854 = vmatprep.subr.mxu0 %v620
        %855 = vmatpush1.msra.mxu0 %v619
        %856 = vmatprep.subr.mxu0 %v626
        %857 = vmatpush1.msra.mxu0 %v625
        %858 = vmatprep.subr.mxu0 %v632
        %859 = vmatpush1.msra.mxu0 %v631
        %860 = vmatprep.subr.mxu0 %v638
        %861 = vmatpush1.msra.mxu0 %v637
        %862 = vmatprep.subr.mxu0 %v644
        %863 = vmatpush1.msra.mxu0 %v643
        %864 = vmatprep.subr.mxu0 %v650
        %865 = vmatpush1.msra.mxu0 %v649
        %866 = vmatprep.subr.mxu0 %v656
        %867 = vmatpush1.msra.mxu0 %v655
        %868 = vmatprep.subr.mxu0 %v662
        %869 = vmatpush1.msra.mxu0 %v661
        %870 = vmatprep.subr.mxu0 %v668
        %871 = vmatpush1.msra.mxu0 %v667
        %872 = vmatprep.subr.mxu0 %v674
        %873 = vmatpush1.msra.mxu0 %v673
        %874 = vmatprep.subr.mxu0 %v680
        %875 = vmatpush1.msra.mxu0 %v679
        %876 = vmatprep.subr.mxu0 %v686
        %877 = vmatpush1.msra.mxu0 %v685
        %878 = vmatprep.subr.mxu0 %v692
        %879 = vmatpush1.msra.mxu0 %v691
        %880 = vmatprep.subr.mxu0 %v698
        %881 = vmatpush1.msra.mxu0 %v697
        %882 = vmatprep.subr.mxu0 %v704
        %883 = vmatpush1.msra.mxu0 %v703
        %884 = vmatprep.subr.mxu0 %v710
        %885 = vmatpush1.msra.mxu0 %v709
        %886 = vmatprep.mubr.f32.mxu0 %v518
        %887 = vmatmul.mubr.f32.gmra.mrb[0].mxu0 %v517
        %v888 = vpop.f32.mrb[0].mxu0
        %v889 = vadd.f32 %v726, %v888
        %v890 = vpop.f32.mrb[0].mxu0
        %v891 = vadd.f32 %v730, %v890
        %892 = vmatprep.mubr.f32.mxu0 %v520
        %893 = vmatmul.mubr.f32.gmra.mrb[0].mxu0 %v519
        %v894 = vpop.f32.mrb[0].mxu0
        %v895 = vadd.f32 %v726, %v894
        %v896 = vpop.f32.mrb[0].mxu0
        %v897 = vadd.f32 %v730, %v896
        %898 = vdwg.mxu0
        %899 = vmatprep.subr.mxu0 %v526
        %900 = vmatpush1.msra.mxu0 %v525
        %901 = vmatprep.subr.mxu0 %v532
        %902 = vmatpush1.msra.mxu0 %v531
        %903 = vmatprep.subr.mxu0 %v538
        %904 = vmatpush1.msra.mxu0 %v537
        %905 = vmatprep.subr.mxu0 %v544
        %906 = vmatpush1.msra.mxu0 %v543
        %907 = vmatprep.subr.mxu0 %v550
        %908 = vmatpush1.msra.mxu0 %v549
        %909 = vmatprep.subr.mxu0 %v556
        %910 = vmatpush1.msra.mxu0 %v555
        %911 = vmatprep.subr.mxu0 %v562
        %912 = vmatpush1.msra.mxu0 %v561
        %913 = vmatprep.subr.mxu0 %v568
        %914 = vmatpush1.msra.mxu0 %v567
        %915 = vmatprep.subr.mxu0 %v574
        %916 = vmatpush1.msra.mxu0 %v573
        %917 = vmatprep.subr.mxu0 %v580
        %918 = vmatpush1.msra.mxu0 %v579
        %919 = vmatprep.subr.mxu0 %v586
        %920 = vmatpush1.msra.mxu0 %v585
        %921 = vmatprep.subr.mxu0 %v592
        %922 = vmatpush1.msra.mxu0 %v591
        %923 = vmatprep.subr.mxu0 %v598
        %924 = vmatpush1.msra.mxu0 %v597
        %925 = vmatprep.subr.mxu0 %v604
        %926 = vmatpush1.msra.mxu0 %v603
        %927 = vmatprep.subr.mxu0 %v610
        %928 = vmatpush1.msra.mxu0 %v609
        %929 = vmatprep.subr.mxu0 %v616
        %930 = vmatpush1.msra.mxu0 %v615
        %931 = vmatprep.subr.mxu0 %v622
        %932 = vmatpush1.msra.mxu0 %v621
        %933 = vmatprep.subr.mxu0 %v628
        %934 = vmatpush1.msra.mxu0 %v627
        %935 = vmatprep.subr.mxu0 %v634
        %936 = vmatpush1.msra.mxu0 %v633
        %937 = vmatprep.subr.mxu0 %v640
        %938 = vmatpush1.msra.mxu0 %v639
        %939 = vmatprep.subr.mxu0 %v646
        %940 = vmatpush1.msra.mxu0 %v645
        %941 = vmatprep.subr.mxu0 %v652
        %942 = vmatpush1.msra.mxu0 %v651
        %943 = vmatprep.subr.mxu0 %v658
        %944 = vmatpush1.msra.mxu0 %v657
        %945 = vmatprep.subr.mxu0 %v664
        %946 = vmatpush1.msra.mxu0 %v663
        %947 = vmatprep.subr.mxu0 %v670
        %948 = vmatpush1.msra.mxu0 %v669
        %949 = vmatprep.subr.mxu0 %v676
        %950 = vmatpush1.msra.mxu0 %v675
        %951 = vmatprep.subr.mxu0 %v682
        %952 = vmatpush1.msra.mxu0 %v681
        %953 = vmatprep.subr.mxu0 %v688
        %954 = vmatpush1.msra.mxu0 %v687
        %955 = vmatprep.subr.mxu0 %v694
        %956 = vmatpush1.msra.mxu0 %v693
        %957 = vmatprep.subr.mxu0 %v700
        %958 = vmatpush1.msra.mxu0 %v699
        %959 = vmatprep.subr.mxu0 %v706
        %960 = vmatpush1.msra.mxu0 %v705
        %961 = vmatprep.subr.mxu0 %v712
        %962 = vmatpush1.msra.mxu0 %v711
        %963 = vmatprep.mubr.f32.mxu0 %v518
        %964 = vmatmul.mubr.f32.gmra.mrb[0].mxu0 %v517
        %v965 = vpop.f32.mrb[0].mxu0
        %v966 = vadd.f32 %v734, %v965
        %v967 = vpop.f32.mrb[0].mxu0
        %v968 = vadd.f32 %v738, %v967
        %969 = vmatprep.mubr.f32.mxu0 %v520
        %970 = vmatmul.mubr.f32.gmra.mrb[0].mxu0 %v519
        %v971 = vpop.f32.mrb[0].mxu0
        %v972 = vadd.f32 %v734, %v971
        %v973 = vpop.f32.mrb[0].mxu0
        %v974 = vadd.f32 %v738, %v973
        %975 = vdwg.mxu0
        %v976 = vmul.f32 %v812, 0.088388346
        %v977 = vmul.f32 %v814, 0.088388346
        %v978 = vmul.f32 %v818, 0.088388346
        %v979 = vmul.f32 %v820, 0.088388346
        %v980 = vld [vmem:[#allocation7] sm:$0xff]
        %v981 = vld [vmem:[#allocation7 + $0x8] sm:$0xff]
        %v982 = vld [vmem:[#allocation7 + $0x10] sm:$0xff]
        %v983 = vld [vmem:[#allocation7 + $0x18] sm:$0xff]
        %v984 = vld [vmem:[#allocation7 + $0x20] sm:$0xff]
        %v985 = vld [vmem:[#allocation7 + $0x28] sm:$0xff]
        %v986 = vld [vmem:[#allocation7 + $0x30] sm:$0xff]
        %v987 = vld [vmem:[#allocation7 + $0x38] sm:$0xff]
        %v988 = vld [vmem:[#allocation7 + $0x40] sm:$0xff]
        %v989 = vld [vmem:[#allocation7 + $0x48] sm:$0xff]
        %v990 = vld [vmem:[#allocation7 + $0x50] sm:$0xff]
        %v991 = vld [vmem:[#allocation7 + $0x58] sm:$0xff]
        %v992 = vld [vmem:[#allocation7 + $0x60] sm:$0xff]
        %v993 = vld [vmem:[#allocation7 + $0x68] sm:$0xff]
        %v994 = vld [vmem:[#allocation7 + $0x70] sm:$0xff]
        %v995 = vld [vmem:[#allocation7 + $0x78] sm:$0xff]
        %v996 = vld [vmem:[#allocation7 + $0x80] sm:$0xff]
        %v997 = vld [vmem:[#allocation7 + $0x88] sm:$0xff]
        %v998 = vld [vmem:[#allocation7 + $0x90] sm:$0xff]
        %v999 = vld [vmem:[#allocation7 + $0x98] sm:$0xff]
        %v1000 = vld [vmem:[#allocation7 + $0xa0] sm:$0xff]
        %v1001 = vld [vmem:[#allocation7 + $0xa8] sm:$0xff]
        %v1002 = vld [vmem:[#allocation7 + $0xb0] sm:$0xff]
        %v1003 = vld [vmem:[#allocation7 + $0xb8] sm:$0xff]
        %v1004 = vld [vmem:[#allocation7 + $0xc0] sm:$0xff]
        %v1005 = vld [vmem:[#allocation7 + $0xc8] sm:$0xff]
        %v1006 = vld [vmem:[#allocation7 + $0xd0] sm:$0xff]
        %v1007 = vld [vmem:[#allocation7 + $0xd8] sm:$0xff]
        %v1008 = vld [vmem:[#allocation7 + $0xe0] sm:$0xff]
        %v1009 = vld [vmem:[#allocation7 + $0xe8] sm:$0xff]
        %v1010 = vld [vmem:[#allocation7 + $0xf0] sm:$0xff]
        %v1011 = vld [vmem:[#allocation7 + $0xf8] sm:$0xff]
        %v1012 = vld [vmem:[#allocation7 + $0x100] sm:$0xff]
        %v1013 = vld [vmem:[#allocation7 + $0x108] sm:$0xff]
        %v1014 = vld [vmem:[#allocation7 + $0x110] sm:$0xff]
        %v1015 = vld [vmem:[#allocation7 + $0x118] sm:$0xff]
        %v1016 = vld [vmem:[#allocation7 + $0x120] sm:$0xff]
        %v1017 = vld [vmem:[#allocation7 + $0x128] sm:$0xff]
        %v1018 = vld [vmem:[#allocation7 + $0x130] sm:$0xff]
        %v1019 = vld [vmem:[#allocation7 + $0x138] sm:$0xff]
        %v1020 = vld [vmem:[#allocation7 + $0x140] sm:$0xff]
        %v1021 = vld [vmem:[#allocation7 + $0x148] sm:$0xff]
        %v1022 = vld [vmem:[#allocation7 + $0x150] sm:$0xff]
        %v1023 = vld [vmem:[#allocation7 + $0x158] sm:$0xff]
        %v1024 = vld [vmem:[#allocation7 + $0x160] sm:$0xff]
        %v1025 = vld [vmem:[#allocation7 + $0x168] sm:$0xff]
        %v1026 = vld [vmem:[#allocation7 + $0x170] sm:$0xff]
        %v1027 = vld [vmem:[#allocation7 + $0x178] sm:$0xff]
        %v1028 = vld [vmem:[#allocation7 + $0x180] sm:$0xff]
        %v1029 = vld [vmem:[#allocation7 + $0x188] sm:$0xff]
        %v1030 = vld [vmem:[#allocation7 + $0x190] sm:$0xff]
        %v1031 = vld [vmem:[#allocation7 + $0x198] sm:$0xff]
        %v1032 = vld [vmem:[#allocation7 + $0x1a0] sm:$0xff]
        %v1033 = vld [vmem:[#allocation7 + $0x1a8] sm:$0xff]
        %v1034 = vld [vmem:[#allocation7 + $0x1b0] sm:$0xff]
        %v1035 = vld [vmem:[#allocation7 + $0x1b8] sm:$0xff]
        %v1036 = vld [vmem:[#allocation7 + $0x1c0] sm:$0xff]
        %v1037 = vld [vmem:[#allocation7 + $0x1c8] sm:$0xff]
        %v1038 = vld [vmem:[#allocation7 + $0x1d0] sm:$0xff]
        %v1039 = vld [vmem:[#allocation7 + $0x1d8] sm:$0xff]
        %v1040 = vld [vmem:[#allocation7 + $0x1e0] sm:$0xff]
        %v1041 = vld [vmem:[#allocation7 + $0x1e8] sm:$0xff]
        %v1042 = vld [vmem:[#allocation7 + $0x1f0] sm:$0xff]
        %v1043 = vld [vmem:[#allocation7 + $0x1f8] sm:$0xff]
        %v1044 = vld [vmem:[%s4] sm:$0x3]
        %v1046 = vlaneseq
        %v1047 = vshrl.u32 %v1046, 7
        %v1048 = vsub.s32 0, %v1047
        %v1049 = vrot.slane %v1044, %v1048
        %v1050 = vlaneseq
        %v1051 = vshrl.u32 %v1050, 7
        %v1052 = vsub.s32 1, %v1051
        %v1053 = vrot.slane %v1044, %v1052
        %1056 = vmatprep.subr.mxu0 0.0
        %1057 = vmatpush1.xpose.msra.mxu0 %v889
        %1058 = vmatprep.subr.mxu0 0.0
        %1059 = vmatpush1.xpose.msra.mxu0 %v895
        %1060 = vmatprep.subr.mxu0 0.0
        %1061 = vmatpush1.xpose.msra.mxu0 0.0
        %1062 = vmatprep.subr.mxu0 0.0
        %1063 = vmatpush1.xpose.msra.mxu0 0.0
        %1064 = vmatprep.subr.mxu0 0.0
        %1065 = vmatpush1.xpose.msra.mxu0 0.0
        %1066 = vmatprep.subr.mxu0 0.0
        %1067 = vmatpush1.xpose.msra.mxu0 0.0
        %1068 = vmatprep.subr.mxu0 0.0
        %1069 = vmatpush1.xpose.msra.mxu0 0.0
        %1070 = vmatprep.subr.mxu0 0.0
        %1071 = vmatpush1.xpose.msra.mxu0 0.0
        %1072 = vmatprep.subr.mxu0 0.0
        %1073 = vmatpush1.xpose.msra.mxu0 0.0
        %1074 = vmatprep.subr.mxu0 0.0
        %1075 = vmatpush1.xpose.msra.mxu0 0.0
        %1076 = vmatprep.subr.mxu0 0.0
        %1077 = vmatpush1.xpose.msra.mxu0 0.0
        %1078 = vmatprep.subr.mxu0 0.0
        %1079 = vmatpush1.xpose.msra.mxu0 0.0
        %1080 = vmatprep.subr.mxu0 0.0
        %1081 = vmatpush1.xpose.msra.mxu0 0.0
        %1082 = vmatprep.subr.mxu0 0.0
        %1083 = vmatpush1.xpose.msra.mxu0 0.0
        %1084 = vmatprep.subr.mxu0 0.0
        %1085 = vmatpush1.xpose.msra.mxu0 0.0
        %1086 = vmatprep.subr.mxu0 0.0
        %1087 = vmatpush1.xpose.msra.mxu0 0.0
        %1088 = vmatprep.subr.mxu0 0.0
        %1089 = vmatpush1.xpose.msra.mxu0 0.0
        %1090 = vmatprep.subr.mxu0 0.0
        %1091 = vmatpush1.xpose.msra.mxu0 0.0
        %1092 = vmatprep.subr.mxu0 0.0
        %1093 = vmatpush1.xpose.msra.mxu0 0.0
        %1094 = vmatprep.subr.mxu0 0.0
        %1095 = vmatpush1.xpose.msra.mxu0 0.0
        %1096 = vmatprep.subr.mxu0 0.0
        %1097 = vmatpush1.xpose.msra.mxu0 0.0
        %1098 = vmatprep.subr.mxu0 0.0
        %1099 = vmatpush1.xpose.msra.mxu0 0.0
        %1100 = vmatprep.subr.mxu0 0.0
        %1101 = vmatpush1.xpose.msra.mxu0 0.0
        %1102 = vmatprep.subr.mxu0 0.0
        %1103 = vmatpush1.xpose.msra.mxu0 0.0
        %1104 = vmatprep.subr.mxu0 0.0
        %1105 = vmatpush1.xpose.msra.mxu0 0.0
        %1106 = vmatprep.subr.mxu0 0.0
        %1107 = vmatpush1.xpose.msra.mxu0 0.0
        %1108 = vmatprep.subr.mxu0 0.0
        %1109 = vmatpush1.xpose.msra.mxu0 0.0
        %1110 = vmatprep.subr.mxu0 0.0
        %1111 = vmatpush1.xpose.msra.mxu0 0.0
        %1112 = vmatprep.subr.mxu0 0.0
        %1113 = vmatpush1.xpose.msra.mxu0 0.0
        %1114 = vmatprep.subr.mxu0 0.0
        %1115 = vmatpush1.xpose.msra.mxu0 0.0
        %1116 = vmatprep.subr.mxu0 0.0
        %1117 = vmatpush1.xpose.msra.mxu0 0.0
        %1118 = vmatprep.subr.mxu0 0.0
        %1119 = vmatpush1.xpose.msra.mxu0 0.0
        %1120 = vmatprep.mubr.f32.mxu0 0.0
        %1121 = vmatmul.mubr.f32.gmra.mrb[0].mxu0 %v976
        %v1122 = vpop.f32.mrb[0].mxu0
        %v1123 = vadd.f32 0.0, %v1122
        %v1124 = vpop.f32.mrb[0].mxu0
        %1125 = vmatprep.mubr.f32.mxu0 0.0
        %1126 = vmatmul.mubr.f32.gmra.mrb[0].mxu0 %v978
        %v1127 = vpop.f32.mrb[0].mxu0
        %v1128 = vadd.f32 0.0, %v1127
        %v1129 = vpop.f32.mrb[0].mxu0
        %1130 = vdwg.mxu0
        %vm1131 = vcmask 130048
        %v1132 = vsel %vm1131, %v1123, -inf
        %1133 = vmax.xlane.f32.xlu0 %v1132
        %v1134 = vpop.xlane.xlu0 %1133
        %v1135 = vsel %vm1131, %v1128, -inf
        %1136 = vmax.xlane.f32.xlu0 %v1135
        %v1137 = vpop.xlane.xlu0 %1136
        %v1138 = vsub.f32 %v1123, %v1134
        %v1139 = vsub.f32 %v1128, %v1137
        %v1140 = vmul.f32 %v1138, 1.442695
        %v1141 = vpow.pop %v1140
        %v1142 = vmul.f32 %v1139, 1.442695
        %v1143 = vpow.pop %v1142
        %v1144 = vsel %vm1131, %v1141, 0.0
        %1145 = vadd.xlane.f32.xlu0 %v1144
        %v1146 = vpop.xlane.xlu0 %1145
        %v1147 = vsel %vm1131, %v1143, 0.0
        %1148 = vadd.xlane.f32.xlu0 %v1147
        %v1149 = vpop.xlane.xlu0 %1148
        %v1150 = vrcp.pop %v1146
        %v1151 = vrcp.pop %v1149
        %v1152 = vmul.f32 %v1141, %v1150
        %v1153 = vmul.f32 %v1143, %v1151
        %v1155 = vsel %vm1131, %v1152, 0
        %v1158 = vsel %vm1131, %v1153, 0
        %1160 = vmatprep.subr.mxu0 0.0
        %1161 = vmatpush1.msra.mxu0 %v966
        %1162 = vmatprep.subr.mxu0 0.0
        %1163 = vmatpush1.msra.mxu0 %v972
        %1164 = vmatprep.subr.mxu0 0.0
        %1165 = vmatpush1.msra.mxu0 0.0
        %1166 = vmatprep.subr.mxu0 0.0
        %1167 = vmatpush1.msra.mxu0 0.0
        %1168 = vmatprep.subr.mxu0 0.0
        %1169 = vmatpush1.msra.mxu0 0.0
        %1170 = vmatprep.subr.mxu0 0.0
        %1171 = vmatpush1.msra.mxu0 0.0
        %1172 = vmatprep.subr.mxu0 0.0
        %1173 = vmatpush1.msra.mxu0 0.0
        %1174 = vmatprep.subr.mxu0 0.0
        %1175 = vmatpush1.msra.mxu0 0.0
        %1176 = vmatprep.subr.mxu0 0.0
        %1177 = vmatpush1.msra.mxu0 0.0
        %1178 = vmatprep.subr.mxu0 0.0
        %1179 = vmatpush1.msra.mxu0 0.0
        %1180 = vmatprep.subr.mxu0 0.0
        %1181 = vmatpush1.msra.mxu0 0.0
        %1182 = vmatprep.subr.mxu0 0.0
        %1183 = vmatpush1.msra.mxu0 0.0
        %1184 = vmatprep.subr.mxu0 0.0
        %1185 = vmatpush1.msra.mxu0 0.0
        %1186 = vmatprep.subr.mxu0 0.0
        %1187 = vmatpush1.msra.mxu0 0.0
        %1188 = vmatprep.subr.mxu0 0.0
        %1189 = vmatpush1.msra.mxu0 0.0
        %1190 = vmatprep.subr.mxu0 0.0
        %1191 = vmatpush1.msra.mxu0 0.0
        %1192 = vmatprep.subr.mxu0 0.0
        %1193 = vmatpush1.msra.mxu0 0.0
        %1194 = vmatprep.subr.mxu0 0.0
        %1195 = vmatpush1.msra.mxu0 0.0
        %1196 = vmatprep.subr.mxu0 0.0
        %1197 = vmatpush1.msra.mxu0 0.0
        %1198 = vmatprep.subr.mxu0 0.0
        %1199 = vmatpush1.msra.mxu0 0.0
        %1200 = vmatprep.subr.mxu0 0.0
        %1201 = vmatpush1.msra.mxu0 0.0
        %1202 = vmatprep.subr.mxu0 0.0
        %1203 = vmatpush1.msra.mxu0 0.0
        %1204 = vmatprep.subr.mxu0 0.0
        %1205 = vmatpush1.msra.mxu0 0.0
        %1206 = vmatprep.subr.mxu0 0.0
        %1207 = vmatpush1.msra.mxu0 0.0
        %1208 = vmatprep.subr.mxu0 0.0
        %1209 = vmatpush1.msra.mxu0 0.0
        %1210 = vmatprep.subr.mxu0 0.0
        %1211 = vmatpush1.msra.mxu0 0.0
        %1212 = vmatprep.subr.mxu0 0.0
        %1213 = vmatpush1.msra.mxu0 0.0
        %1214 = vmatprep.subr.mxu0 0.0
        %1215 = vmatpush1.msra.mxu0 0.0
        %1216 = vmatprep.subr.mxu0 0.0
        %1217 = vmatpush1.msra.mxu0 0.0
        %1218 = vmatprep.subr.mxu0 0.0
        %1219 = vmatpush1.msra.mxu0 0.0
        %1220 = vmatprep.subr.mxu0 0.0
        %1221 = vmatpush1.msra.mxu0 0.0
        %1222 = vmatprep.subr.mxu0 0.0
        %1223 = vmatpush1.msra.mxu0 0.0
        %1224 = vmatprep.mubr.f32.mxu0 0.0
        %1225 = vmatmul.mubr.f32.gmra.mrb[0].mxu0 %v1155
        %v1226 = vpop.f32.mrb[0].mxu0
        %v1227 = vadd.f32 0.0, %v1226
        %v1228 = vpop.f32.mrb[0].mxu0
        %1229 = vmatprep.mubr.f32.mxu0 0.0
        %1230 = vmatmul.mubr.f32.gmra.mrb[0].mxu0 %v1158
        %v1231 = vpop.f32.mrb[0].mxu0
        %v1232 = vadd.f32 0.0, %v1231
        %v1233 = vpop.f32.mrb[0].mxu0
        %1234 = vdwg.mxu0
        %1235 = vmatprep.subr.mxu0 %v981
        %1236 = vmatpush1.msra.mxu0 %v980
        %1237 = vmatprep.subr.mxu0 %v983
        %1238 = vmatpush1.msra.mxu0 %v982
        %1239 = vmatprep.subr.mxu0 %v985
        %1240 = vmatpush1.msra.mxu0 %v984
        %1241 = vmatprep.subr.mxu0 %v987
        %1242 = vmatpush1.msra.mxu0 %v986
        %1243 = vmatprep.subr.mxu0 %v989
        %1244 = vmatpush1.msra.mxu0 %v988
        %1245 = vmatprep.subr.mxu0 %v991
        %1246 = vmatpush1.msra.mxu0 %v990
        %1247 = vmatprep.subr.mxu0 %v993
        %1248 = vmatpush1.msra.mxu0 %v992
        %1249 = vmatprep.subr.mxu0 %v995
        %1250 = vmatpush1.msra.mxu0 %v994
        %1251 = vmatprep.subr.mxu0 %v997
        %1252 = vmatpush1.msra.mxu0 %v996
        %1253 = vmatprep.subr.mxu0 %v999
        %1254 = vmatpush1.msra.mxu0 %v998
        %1255 = vmatprep.subr.mxu0 %v1001
        %1256 = vmatpush1.msra.mxu0 %v1000
        %1257 = vmatprep.subr.mxu0 %v1003
        %1258 = vmatpush1.msra.mxu0 %v1002
        %1259 = vmatprep.subr.mxu0 %v1005
        %1260 = vmatpush1.msra.mxu0 %v1004
        %1261 = vmatprep.subr.mxu0 %v1007
        %1262 = vmatpush1.msra.mxu0 %v1006
        %1263 = vmatprep.subr.mxu0 %v1009
        %1264 = vmatpush1.msra.mxu0 %v1008
        %1265 = vmatprep.subr.mxu0 %v1011
        %1266 = vmatpush1.msra.mxu0 %v1010
        %1267 = vmatprep.subr.mxu0 0.0
        %1268 = vmatpush1.msra.mxu0 0.0
        %1269 = vmatprep.subr.mxu0 0.0
        %1270 = vmatpush1.msra.mxu0 0.0
        %1271 = vmatprep.subr.mxu0 0.0
        %1272 = vmatpush1.msra.mxu0 0.0
        %1273 = vmatprep.subr.mxu0 0.0
        %1274 = vmatpush1.msra.mxu0 0.0
        %1275 = vmatprep.subr.mxu0 0.0
        %1276 = vmatpush1.msra.mxu0 0.0
        %1277 = vmatprep.subr.mxu0 0.0
        %1278 = vmatpush1.msra.mxu0 0.0
        %1279 = vmatprep.subr.mxu0 0.0
        %1280 = vmatpush1.msra.mxu0 0.0
        %1281 = vmatprep.subr.mxu0 0.0
        %1282 = vmatpush1.msra.mxu0 0.0
        %1283 = vmatprep.subr.mxu0 0.0
        %1284 = vmatpush1.msra.mxu0 0.0
        %1285 = vmatprep.subr.mxu0 0.0
        %1286 = vmatpush1.msra.mxu0 0.0
        %1287 = vmatprep.subr.mxu0 0.0
        %1288 = vmatpush1.msra.mxu0 0.0
        %1289 = vmatprep.subr.mxu0 0.0
        %1290 = vmatpush1.msra.mxu0 0.0
        %1291 = vmatprep.subr.mxu0 0.0
        %1292 = vmatpush1.msra.mxu0 0.0
        %1293 = vmatprep.subr.mxu0 0.0
        %1294 = vmatpush1.msra.mxu0 0.0
        %1295 = vmatprep.subr.mxu0 0.0
        %1296 = vmatpush1.msra.mxu0 0.0
        %1297 = vmatprep.subr.mxu0 0.0
        %1298 = vmatpush1.msra.mxu0 0.0
        %1299 = vmatprep.mubr.f32.mxu0 0.0
        %1300 = vmatmul.mubr.f32.gmra.mrb[0].mxu0 %v1227
        %v1301 = vpop.f32.mrb[0].mxu0
        %v1302 = vadd.f32 0.0, %v1301
        %v1303 = vpop.f32.mrb[0].mxu0
        %v1304 = vadd.f32 0.0, %v1303
        %1305 = vmatprep.mubr.f32.mxu0 0.0
        %1306 = vmatmul.mubr.f32.gmra.mrb[0].mxu0 %v1232
        %v1307 = vpop.f32.mrb[0].mxu0
        %v1308 = vadd.f32 0.0, %v1307
        %v1309 = vpop.f32.mrb[0].mxu0
        %v1310 = vadd.f32 0.0, %v1309
        %1311 = vdwg.mxu0
        %v1312 = vadd.f32 %v1049, %v1302
        %v1313 = vadd.f32 %v1053, %v1304
        %v1314 = vadd.f32 %v1049, %v1308
        %v1315 = vadd.f32 %v1053, %v1310
        %1316 = vmatprep.subr.mxu0 0.0
        %1317 = vmatpush1.xpose.msra.mxu0 %v891
        %1318 = vmatprep.subr.mxu0 0.0
        %1319 = vmatpush1.xpose.msra.mxu0 %v897
        %1320 = vmatprep.subr.mxu0 0.0
        %1321 = vmatpush1.xpose.msra.mxu0 0.0
        %1322 = vmatprep.subr.mxu0 0.0
        %1323 = vmatpush1.xpose.msra.mxu0 0.0
        %1324 = vmatprep.subr.mxu0 0.0
        %1325 = vmatpush1.xpose.msra.mxu0 0.0
        %1326 = vmatprep.subr.mxu0 0.0
        %1327 = vmatpush1.xpose.msra.mxu0 0.0
        %1328 = vmatprep.subr.mxu0 0.0
        %1329 = vmatpush1.xpose.msra.mxu0 0.0
        %1330 = vmatprep.subr.mxu0 0.0
        %1331 = vmatpush1.xpose.msra.mxu0 0.0
        %1332 = vmatprep.subr.mxu0 0.0
        %1333 = vmatpush1.xpose.msra.mxu0 0.0
        %1334 = vmatprep.subr.mxu0 0.0
        %1335 = vmatpush1.xpose.msra.mxu0 0.0
        %1336 = vmatprep.subr.mxu0 0.0
        %1337 = vmatpush1.xpose.msra.mxu0 0.0
        %1338 = vmatprep.subr.mxu0 0.0
        %1339 = vmatpush1.xpose.msra.mxu0 0.0
        %1340 = vmatprep.subr.mxu0 0.0
        %1341 = vmatpush1.xpose.msra.mxu0 0.0
        %1342 = vmatprep.subr.mxu0 0.0
        %1343 = vmatpush1.xpose.msra.mxu0 0.0
        %1344 = vmatprep.subr.mxu0 0.0
        %1345 = vmatpush1.xpose.msra.mxu0 0.0
        %1346 = vmatprep.subr.mxu0 0.0
        %1347 = vmatpush1.xpose.msra.mxu0 0.0
        %1348 = vmatprep.subr.mxu0 0.0
        %1349 = vmatpush1.xpose.msra.mxu0 0.0
        %1350 = vmatprep.subr.mxu0 0.0
        %1351 = vmatpush1.xpose.msra.mxu0 0.0
        %1352 = vmatprep.subr.mxu0 0.0
        %1353 = vmatpush1.xpose.msra.mxu0 0.0
        %1354 = vmatprep.subr.mxu0 0.0
        %1355 = vmatpush1.xpose.msra.mxu0 0.0
        %1356 = vmatprep.subr.mxu0 0.0
        %1357 = vmatpush1.xpose.msra.mxu0 0.0
        %1358 = vmatprep.subr.mxu0 0.0
        %1359 = vmatpush1.xpose.msra.mxu0 0.0
        %1360 = vmatprep.subr.mxu0 0.0
        %1361 = vmatpush1.xpose.msra.mxu0 0.0
        %1362 = vmatprep.subr.mxu0 0.0
        %1363 = vmatpush1.xpose.msra.mxu0 0.0
        %1364 = vmatprep.subr.mxu0 0.0
        %1365 = vmatpush1.xpose.msra.mxu0 0.0
        %1366 = vmatprep.subr.mxu0 0.0
        %1367 = vmatpush1.xpose.msra.mxu0 0.0
        %1368 = vmatprep.subr.mxu0 0.0
        %1369 = vmatpush1.xpose.msra.mxu0 0.0
        %1370 = vmatprep.subr.mxu0 0.0
        %1371 = vmatpush1.xpose.msra.mxu0 0.0
        %1372 = vmatprep.subr.mxu0 0.0
        %1373 = vmatpush1.xpose.msra.mxu0 0.0
        %1374 = vmatprep.subr.mxu0 0.0
        %1375 = vmatpush1.xpose.msra.mxu0 0.0
        %1376 = vmatprep.subr.mxu0 0.0
        %1377 = vmatpush1.xpose.msra.mxu0 0.0
        %1378 = vmatprep.subr.mxu0 0.0
        %1379 = vmatpush1.xpose.msra.mxu0 0.0
        %1380 = vmatprep.mubr.f32.mxu0 0.0
        %1381 = vmatmul.mubr.f32.gmra.mrb[0].mxu0 %v977
        %v1382 = vpop.f32.mrb[0].mxu0
        %v1383 = vadd.f32 0.0, %v1382
        %v1384 = vpop.f32.mrb[0].mxu0
        %1385 = vmatprep.mubr.f32.mxu0 0.0
        %1386 = vmatmul.mubr.f32.gmra.mrb[0].mxu0 %v979
        %v1387 = vpop.f32.mrb[0].mxu0
        %v1388 = vadd.f32 0.0, %v1387
        %v1389 = vpop.f32.mrb[0].mxu0
        %1390 = vdwg.mxu0
        %v1391 = vsel %vm1131, %v1383, -inf
        %1392 = vmax.xlane.f32.xlu0 %v1391
        %v1393 = vpop.xlane.xlu0 %1392
        %v1394 = vsel %vm1131, %v1388, -inf
        %1395 = vmax.xlane.f32.xlu0 %v1394
        %v1396 = vpop.xlane.xlu0 %1395
        %v1397 = vsub.f32 %v1383, %v1393
        %v1398 = vsub.f32 %v1388, %v1396
        %v1399 = vmul.f32 %v1397, 1.442695
        %v1400 = vpow.pop %v1399
        %v1401 = vmul.f32 %v1398, 1.442695
        %v1402 = vpow.pop %v1401
        %v1403 = vsel %vm1131, %v1400, 0.0
        %1404 = vadd.xlane.f32.xlu0 %v1403
        %v1405 = vpop.xlane.xlu0 %1404
        %v1406 = vsel %vm1131, %v1402, 0.0
        %1407 = vadd.xlane.f32.xlu0 %v1406
        %v1408 = vpop.xlane.xlu0 %1407
        %v1409 = vrcp.pop %v1405
        %v1410 = vrcp.pop %v1408
        %v1411 = vmul.f32 %v1400, %v1409
        %v1412 = vmul.f32 %v1402, %v1410
        %v1414 = vsel %vm1131, %v1411, 0
        %v1417 = vsel %vm1131, %v1412, 0
        %1419 = vmatprep.subr.mxu0 0.0
        %1420 = vmatpush1.msra.mxu0 %v968
        %1421 = vmatprep.subr.mxu0 0.0
        %1422 = vmatpush1.msra.mxu0 %v974
        %1423 = vmatprep.subr.mxu0 0.0
        %1424 = vmatpush1.msra.mxu0 0.0
        %1425 = vmatprep.subr.mxu0 0.0
        %1426 = vmatpush1.msra.mxu0 0.0
        %1427 = vmatprep.subr.mxu0 0.0
        %1428 = vmatpush1.msra.mxu0 0.0
        %1429 = vmatprep.subr.mxu0 0.0
        %1430 = vmatpush1.msra.mxu0 0.0
        %1431 = vmatprep.subr.mxu0 0.0
        %1432 = vmatpush1.msra.mxu0 0.0
        %1433 = vmatprep.subr.mxu0 0.0
        %1434 = vmatpush1.msra.mxu0 0.0
        %1435 = vmatprep.subr.mxu0 0.0
        %1436 = vmatpush1.msra.mxu0 0.0
        %1437 = vmatprep.subr.mxu0 0.0
        %1438 = vmatpush1.msra.mxu0 0.0
        %1439 = vmatprep.subr.mxu0 0.0
        %1440 = vmatpush1.msra.mxu0 0.0
        %1441 = vmatprep.subr.mxu0 0.0
        %1442 = vmatpush1.msra.mxu0 0.0
        %1443 = vmatprep.subr.mxu0 0.0
        %1444 = vmatpush1.msra.mxu0 0.0
        %1445 = vmatprep.subr.mxu0 0.0
        %1446 = vmatpush1.msra.mxu0 0.0
        %1447 = vmatprep.subr.mxu0 0.0
        %1448 = vmatpush1.msra.mxu0 0.0
        %1449 = vmatprep.subr.mxu0 0.0
        %1450 = vmatpush1.msra.mxu0 0.0
        %1451 = vmatprep.subr.mxu0 0.0
        %1452 = vmatpush1.msra.mxu0 0.0
        %1453 = vmatprep.subr.mxu0 0.0
        %1454 = vmatpush1.msra.mxu0 0.0
        %1455 = vmatprep.subr.mxu0 0.0
        %1456 = vmatpush1.msra.mxu0 0.0
        %1457 = vmatprep.subr.mxu0 0.0
        %1458 = vmatpush1.msra.mxu0 0.0
        %1459 = vmatprep.subr.mxu0 0.0
        %1460 = vmatpush1.msra.mxu0 0.0
        %1461 = vmatprep.subr.mxu0 0.0
        %1462 = vmatpush1.msra.mxu0 0.0
        %1463 = vmatprep.subr.mxu0 0.0
        %1464 = vmatpush1.msra.mxu0 0.0
        %1465 = vmatprep.subr.mxu0 0.0
        %1466 = vmatpush1.msra.mxu0 0.0
        %1467 = vmatprep.subr.mxu0 0.0
        %1468 = vmatpush1.msra.mxu0 0.0
        %1469 = vmatprep.subr.mxu0 0.0
        %1470 = vmatpush1.msra.mxu0 0.0
        %1471 = vmatprep.subr.mxu0 0.0
        %1472 = vmatpush1.msra.mxu0 0.0
        %1473 = vmatprep.subr.mxu0 0.0
        %1474 = vmatpush1.msra.mxu0 0.0
        %1475 = vmatprep.subr.mxu0 0.0
        %1476 = vmatpush1.msra.mxu0 0.0
        %1477 = vmatprep.subr.mxu0 0.0
        %1478 = vmatpush1.msra.mxu0 0.0
        %1479 = vmatprep.subr.mxu0 0.0
        %1480 = vmatpush1.msra.mxu0 0.0
        %1481 = vmatprep.subr.mxu0 0.0
        %1482 = vmatpush1.msra.mxu0 0.0
        %1483 = vmatprep.mubr.f32.mxu0 0.0
        %1484 = vmatmul.mubr.f32.gmra.mrb[0].mxu0 %v1414
        %v1485 = vpop.f32.mrb[0].mxu0
        %v1486 = vadd.f32 0.0, %v1485
        %v1487 = vpop.f32.mrb[0].mxu0
        %1488 = vmatprep.mubr.f32.mxu0 0.0
        %1489 = vmatmul.mubr.f32.gmra.mrb[0].mxu0 %v1417
        %v1490 = vpop.f32.mrb[0].mxu0
        %v1491 = vadd.f32 0.0, %v1490
        %v1492 = vpop.f32.mrb[0].mxu0
        %1493 = vdwg.mxu0
        %1494 = vmatprep.subr.mxu0 %v1013
        %1495 = vmatpush1.msra.mxu0 %v1012
        %1496 = vmatprep.subr.mxu0 %v1015
        %1497 = vmatpush1.msra.mxu0 %v1014
        %1498 = vmatprep.subr.mxu0 %v1017
        %1499 = vmatpush1.msra.mxu0 %v1016
        %1500 = vmatprep.subr.mxu0 %v1019
        %1501 = vmatpush1.msra.mxu0 %v1018
        %1502 = vmatprep.subr.mxu0 %v1021
        %1503 = vmatpush1.msra.mxu0 %v1020
        %1504 = vmatprep.subr.mxu0 %v1023
        %1505 = vmatpush1.msra.mxu0 %v1022
        %1506 = vmatprep.subr.mxu0 %v1025
        %1507 = vmatpush1.msra.mxu0 %v1024
        %1508 = vmatprep.subr.mxu0 %v1027
        %1509 = vmatpush1.msra.mxu0 %v1026
        %1510 = vmatprep.subr.mxu0 %v1029
        %1511 = vmatpush1.msra.mxu0 %v1028
        %1512 = vmatprep.subr.mxu0 %v1031
        %1513 = vmatpush1.msra.mxu0 %v1030
        %1514 = vmatprep.subr.mxu0 %v1033
        %1515 = vmatpush1.msra.mxu0 %v1032
        %1516 = vmatprep.subr.mxu0 %v1035
        %1517 = vmatpush1.msra.mxu0 %v1034
        %1518 = vmatprep.subr.mxu0 %v1037
        %1519 = vmatpush1.msra.mxu0 %v1036
        %1520 = vmatprep.subr.mxu0 %v1039
        %1521 = vmatpush1.msra.mxu0 %v1038
        %1522 = vmatprep.subr.mxu0 %v1041
        %1523 = vmatpush1.msra.mxu0 %v1040
        %1524 = vmatprep.subr.mxu0 %v1043
        %1525 = vmatpush1.msra.mxu0 %v1042
        %1526 = vmatprep.subr.mxu0 0.0
        %1527 = vmatpush1.msra.mxu0 0.0
        %1528 = vmatprep.subr.mxu0 0.0
        %1529 = vmatpush1.msra.mxu0 0.0
        %1530 = vmatprep.subr.mxu0 0.0
        %1531 = vmatpush1.msra.mxu0 0.0
        %1532 = vmatprep.subr.mxu0 0.0
        %1533 = vmatpush1.msra.mxu0 0.0
        %1534 = vmatprep.subr.mxu0 0.0
        %1535 = vmatpush1.msra.mxu0 0.0
        %1536 = vmatprep.subr.mxu0 0.0
        %1537 = vmatpush1.msra.mxu0 0.0
        %1538 = vmatprep.subr.mxu0 0.0
        %1539 = vmatpush1.msra.mxu0 0.0
        %1540 = vmatprep.subr.mxu0 0.0
        %1541 = vmatpush1.msra.mxu0 0.0
        %1542 = vmatprep.subr.mxu0 0.0
        %1543 = vmatpush1.msra.mxu0 0.0
        %1544 = vmatprep.subr.mxu0 0.0
        %1545 = vmatpush1.msra.mxu0 0.0
        %1546 = vmatprep.subr.mxu0 0.0
        %1547 = vmatpush1.msra.mxu0 0.0
        %1548 = vmatprep.subr.mxu0 0.0
        %1549 = vmatpush1.msra.mxu0 0.0
        %1550 = vmatprep.subr.mxu0 0.0
        %1551 = vmatpush1.msra.mxu0 0.0
        %1552 = vmatprep.subr.mxu0 0.0
        %1553 = vmatpush1.msra.mxu0 0.0
        %1554 = vmatprep.subr.mxu0 0.0
        %1555 = vmatpush1.msra.mxu0 0.0
        %1556 = vmatprep.subr.mxu0 0.0
        %1557 = vmatpush1.msra.mxu0 0.0
        %1558 = vmatprep.mubr.f32.mxu0 0.0
        %1559 = vmatmul.mubr.f32.gmra.mrb[0].mxu0 %v1486
        %v1560 = vpop.f32.mrb[0].mxu0
        %v1561 = vadd.f32 0.0, %v1560
        %v1562 = vpop.f32.mrb[0].mxu0
        %v1563 = vadd.f32 0.0, %v1562
        %1564 = vmatprep.mubr.f32.mxu0 0.0
        %1565 = vmatmul.mubr.f32.gmra.mrb[0].mxu0 %v1491
        %v1566 = vpop.f32.mrb[0].mxu0
        %v1567 = vadd.f32 0.0, %v1566
        %v1568 = vpop.f32.mrb[0].mxu0
        %v1569 = vadd.f32 0.0, %v1568
        %1570 = vdwg.mxu0
        %v1571 = vadd.f32 %v1312, %v1561
        %v1572 = vadd.f32 %v1313, %v1563
        %v1573 = vadd.f32 %v1314, %v1567
        %v1574 = vadd.f32 %v1315, %v1569
        %v1575 = vadd.f32 %v517, %v1571
        %v1576 = vadd.f32 %v518, %v1572
        %v1577 = vadd.f32 %v519, %v1573
        %v1578 = vadd.f32 %v520, %v1574
        %v1579 = vld [vmem:[%s9] sm:$0x3]
        %v1580 = vld [vmem:[%s10] sm:$0x3]
        %v1581 = vadd.f32 %v1575, %v1576
        %1582 = vadd.xlane.f32.xlu0 %v1581
        %v1583 = vpop.xlane.xlu0 %1582
        %v1584 = vadd.f32 %v1577, %v1578
        %1585 = vadd.xlane.f32.xlu0 %v1584
        %v1586 = vpop.xlane.xlu0 %1585
        %v1587 = vrcp.pop 256.0
        %v1588 = vmul.f32 %v1583, %v1587
        %v1589 = vmul.f32 %v1586, %v1587
        %v1590 = vsub.f32 %v1575, %v1588
        %v1591 = vsub.f32 %v1576, %v1588
        %v1592 = vsub.f32 %v1577, %v1589
        %v1593 = vsub.f32 %v1578, %v1589
        %v1594 = vmul.f32 %v1590, %v1590
        %v1595 = vmul.f32 %v1591, %v1591
        %v1596 = vmul.f32 %v1592, %v1592
        %v1597 = vmul.f32 %v1593, %v1593
        %v1598 = vadd.f32 %v1594, %v1595
        %1599 = vadd.xlane.f32.xlu0 %v1598
        %v1600 = vpop.xlane.xlu0 %1599
        %v1601 = vadd.f32 %v1596, %v1597
        %1602 = vadd.xlane.f32.xlu0 %v1601
        %v1603 = vpop.xlane.xlu0 %1602
        %v1604 = vmul.f32 %v1600, %v1587
        %v1605 = vmul.f32 %v1603, %v1587
        %v1606 = vadd.f32 %v1604, 1e-05
        %v1607 = vadd.f32 %v1605, 1e-05
        %v1608 = vrsqrt.pop %v1606
        %v1609 = vrsqrt.pop %v1607
        %v1610 = vmul.f32 %v1590, %v1608
        %v1611 = vmul.f32 %v1591, %v1608
        %v1612 = vmul.f32 %v1592, %v1609
        %v1613 = vmul.f32 %v1593, %v1609
        %v1615 = vlaneseq
        %v1616 = vshrl.u32 %v1615, 7
        %v1617 = vsub.s32 0, %v1616
        %v1618 = vrot.slane %v1579, %v1617
        %v1619 = vlaneseq
        %v1620 = vshrl.u32 %v1619, 7
        %v1621 = vsub.s32 1, %v1620
        %v1622 = vrot.slane %v1579, %v1621
        %v1625 = vmul.f32 %v1610, %v1618
        %v1626 = vmul.f32 %v1611, %v1622
        %v1627 = vmul.f32 %v1612, %v1618
        %v1628 = vmul.f32 %v1613, %v1622
        %v1630 = vlaneseq
        %v1631 = vshrl.u32 %v1630, 7
        %v1632 = vsub.s32 0, %v1631
        %v1633 = vrot.slane %v1580, %v1632
        %v1634 = vlaneseq
        %v1635 = vshrl.u32 %v1634, 7
        %v1636 = vsub.s32 1, %v1635
        %v1637 = vrot.slane %v1580, %v1636
        %v1640 = vadd.f32 %v1625, %v1633
        %v1641 = vadd.f32 %v1626, %v1637
        %v1642 = vadd.f32 %v1627, %v1633
        %v1643 = vadd.f32 %v1628, %v1637
        %v1644 = vld [vmem:[#allocation8] sm:$0xff]
        %v1645 = vld [vmem:[#allocation8 + $0x8] sm:$0xff]
        %v1646 = vld [vmem:[#allocation8 + $0x10] sm:$0xff]
        %v1647 = vld [vmem:[#allocation8 + $0x18] sm:$0xff]
        %v1648 = vld [vmem:[#allocation8 + $0x20] sm:$0xff]
        %v1649 = vld [vmem:[#allocation8 + $0x28] sm:$0xff]
        %v1650 = vld [vmem:[#allocation8 + $0x30] sm:$0xff]
        %v1651 = vld [vmem:[#allocation8 + $0x38] sm:$0xff]
        %v1652 = vld [vmem:[#allocation8 + $0x40] sm:$0xff]
        %v1653 = vld [vmem:[#allocation8 + $0x48] sm:$0xff]
        %v1654 = vld [vmem:[#allocation8 + $0x50] sm:$0xff]
        %v1655 = vld [vmem:[#allocation8 + $0x58] sm:$0xff]
        %v1656 = vld [vmem:[#allocation8 + $0x60] sm:$0xff]
        %v1657 = vld [vmem:[#allocation8 + $0x68] sm:$0xff]
        %v1658 = vld [vmem:[#allocation8 + $0x70] sm:$0xff]
        %v1659 = vld [vmem:[#allocation8 + $0x78] sm:$0xff]
        %v1660 = vld [vmem:[#allocation8 + $0x80] sm:$0xff]
        %v1661 = vld [vmem:[#allocation8 + $0x88] sm:$0xff]
        %v1662 = vld [vmem:[#allocation8 + $0x90] sm:$0xff]
        %v1663 = vld [vmem:[#allocation8 + $0x98] sm:$0xff]
        %v1664 = vld [vmem:[#allocation8 + $0xa0] sm:$0xff]
        %v1665 = vld [vmem:[#allocation8 + $0xa8] sm:$0xff]
        %v1666 = vld [vmem:[#allocation8 + $0xb0] sm:$0xff]
        %v1667 = vld [vmem:[#allocation8 + $0xb8] sm:$0xff]
        %v1668 = vld [vmem:[#allocation8 + $0xc0] sm:$0xff]
        %v1669 = vld [vmem:[#allocation8 + $0xc8] sm:$0xff]
        %v1670 = vld [vmem:[#allocation8 + $0xd0] sm:$0xff]
        %v1671 = vld [vmem:[#allocation8 + $0xd8] sm:$0xff]
        %v1672 = vld [vmem:[#allocation8 + $0xe0] sm:$0xff]
        %v1673 = vld [vmem:[#allocation8 + $0xe8] sm:$0xff]
        %v1674 = vld [vmem:[#allocation8 + $0xf0] sm:$0xff]
        %v1675 = vld [vmem:[#allocation8 + $0xf8] sm:$0xff]
        %v1676 = vld [vmem:[#allocation8 + $0x100] sm:$0xff]
        %v1677 = vld [vmem:[#allocation8 + $0x108] sm:$0xff]
        %v1678 = vld [vmem:[#allocation8 + $0x110] sm:$0xff]
        %v1679 = vld [vmem:[#allocation8 + $0x118] sm:$0xff]
        %v1680 = vld [vmem:[#allocation8 + $0x120] sm:$0xff]
        %v1681 = vld [vmem:[#allocation8 + $0x128] sm:$0xff]
        %v1682 = vld [vmem:[#allocation8 + $0x130] sm:$0xff]
        %v1683 = vld [vmem:[#allocation8 + $0x138] sm:$0xff]
        %v1684 = vld [vmem:[#allocation8 + $0x140] sm:$0xff]
        %v1685 = vld [vmem:[#allocation8 + $0x148] sm:$0xff]
        %v1686 = vld [vmem:[#allocation8 + $0x150] sm:$0xff]
        %v1687 = vld [vmem:[#allocation8 + $0x158] sm:$0xff]
        %v1688 = vld [vmem:[#allocation8 + $0x160] sm:$0xff]
        %v1689 = vld [vmem:[#allocation8 + $0x168] sm:$0xff]
        %v1690 = vld [vmem:[#allocation8 + $0x170] sm:$0xff]
        %v1691 = vld [vmem:[#allocation8 + $0x178] sm:$0xff]
        %v1692 = vld [vmem:[#allocation8 + $0x180] sm:$0xff]
        %v1693 = vld [vmem:[#allocation8 + $0x188] sm:$0xff]
        %v1694 = vld [vmem:[#allocation8 + $0x190] sm:$0xff]
        %v1695 = vld [vmem:[#allocation8 + $0x198] sm:$0xff]
        %v1696 = vld [vmem:[#allocation8 + $0x1a0] sm:$0xff]
        %v1697 = vld [vmem:[#allocation8 + $0x1a8] sm:$0xff]
        %v1698 = vld [vmem:[#allocation8 + $0x1b0] sm:$0xff]
        %v1699 = vld [vmem:[#allocation8 + $0x1b8] sm:$0xff]
        %v1700 = vld [vmem:[#allocation8 + $0x1c0] sm:$0xff]
        %v1701 = vld [vmem:[#allocation8 + $0x1c8] sm:$0xff]
        %v1702 = vld [vmem:[#allocation8 + $0x1d0] sm:$0xff]
        %v1703 = vld [vmem:[#allocation8 + $0x1d8] sm:$0xff]
        %v1704 = vld [vmem:[#allocation8 + $0x1e0] sm:$0xff]
        %v1705 = vld [vmem:[#allocation8 + $0x1e8] sm:$0xff]
        %v1706 = vld [vmem:[#allocation8 + $0x1f0] sm:$0xff]
        %v1707 = vld [vmem:[#allocation8 + $0x1f8] sm:$0xff]
        %v1708 = vld [vmem:[#allocation8 + $0x200] sm:$0xff]
        %v1709 = vld [vmem:[#allocation8 + $0x208] sm:$0xff]
        %v1710 = vld [vmem:[#allocation8 + $0x210] sm:$0xff]
        %v1711 = vld [vmem:[#allocation8 + $0x218] sm:$0xff]
        %v1712 = vld [vmem:[#allocation8 + $0x220] sm:$0xff]
        %v1713 = vld [vmem:[#allocation8 + $0x228] sm:$0xff]
        %v1714 = vld [vmem:[#allocation8 + $0x230] sm:$0xff]
        %v1715 = vld [vmem:[#allocation8 + $0x238] sm:$0xff]
        %v1716 = vld [vmem:[#allocation8 + $0x240] sm:$0xff]
        %v1717 = vld [vmem:[#allocation8 + $0x248] sm:$0xff]
        %v1718 = vld [vmem:[#allocation8 + $0x250] sm:$0xff]
        %v1719 = vld [vmem:[#allocation8 + $0x258] sm:$0xff]
        %v1720 = vld [vmem:[#allocation8 + $0x260] sm:$0xff]
        %v1721 = vld [vmem:[#allocation8 + $0x268] sm:$0xff]
        %v1722 = vld [vmem:[#allocation8 + $0x270] sm:$0xff]
        %v1723 = vld [vmem:[#allocation8 + $0x278] sm:$0xff]
        %v1724 = vld [vmem:[#allocation8 + $0x280] sm:$0xff]
        %v1725 = vld [vmem:[#allocation8 + $0x288] sm:$0xff]
        %v1726 = vld [vmem:[#allocation8 + $0x290] sm:$0xff]
        %v1727 = vld [vmem:[#allocation8 + $0x298] sm:$0xff]
        %v1728 = vld [vmem:[#allocation8 + $0x2a0] sm:$0xff]
        %v1729 = vld [vmem:[#allocation8 + $0x2a8] sm:$0xff]
        %v1730 = vld [vmem:[#allocation8 + $0x2b0] sm:$0xff]
        %v1731 = vld [vmem:[#allocation8 + $0x2b8] sm:$0xff]
        %v1732 = vld [vmem:[#allocation8 + $0x2c0] sm:$0xff]
        %v1733 = vld [vmem:[#allocation8 + $0x2c8] sm:$0xff]
        %v1734 = vld [vmem:[#allocation8 + $0x2d0] sm:$0xff]
        %v1735 = vld [vmem:[#allocation8 + $0x2d8] sm:$0xff]
        %v1736 = vld [vmem:[#allocation8 + $0x2e0] sm:$0xff]
        %v1737 = vld [vmem:[#allocation8 + $0x2e8] sm:$0xff]
        %v1738 = vld [vmem:[#allocation8 + $0x2f0] sm:$0xff]
        %v1739 = vld [vmem:[#allocation8 + $0x2f8] sm:$0xff]
        %v1740 = vld [vmem:[#allocation8 + $0x300] sm:$0xff]
        %v1741 = vld [vmem:[#allocation8 + $0x308] sm:$0xff]
        %v1742 = vld [vmem:[#allocation8 + $0x310] sm:$0xff]
        %v1743 = vld [vmem:[#allocation8 + $0x318] sm:$0xff]
        %v1744 = vld [vmem:[#allocation8 + $0x320] sm:$0xff]
        %v1745 = vld [vmem:[#allocation8 + $0x328] sm:$0xff]
        %v1746 = vld [vmem:[#allocation8 + $0x330] sm:$0xff]
        %v1747 = vld [vmem:[#allocation8 + $0x338] sm:$0xff]
        %v1748 = vld [vmem:[#allocation8 + $0x340] sm:$0xff]
        %v1749 = vld [vmem:[#allocation8 + $0x348] sm:$0xff]
        %v1750 = vld [vmem:[#allocation8 + $0x350] sm:$0xff]
        %v1751 = vld [vmem:[#allocation8 + $0x358] sm:$0xff]
        %v1752 = vld [vmem:[#allocation8 + $0x360] sm:$0xff]
        %v1753 = vld [vmem:[#allocation8 + $0x368] sm:$0xff]
        %v1754 = vld [vmem:[#allocation8 + $0x370] sm:$0xff]
        %v1755 = vld [vmem:[#allocation8 + $0x378] sm:$0xff]
        %v1756 = vld [vmem:[#allocation8 + $0x380] sm:$0xff]
        %v1757 = vld [vmem:[#allocation8 + $0x388] sm:$0xff]
        %v1758 = vld [vmem:[#allocation8 + $0x390] sm:$0xff]
        %v1759 = vld [vmem:[#allocation8 + $0x398] sm:$0xff]
        %v1760 = vld [vmem:[#allocation8 + $0x3a0] sm:$0xff]
        %v1761 = vld [vmem:[#allocation8 + $0x3a8] sm:$0xff]
        %v1762 = vld [vmem:[#allocation8 + $0x3b0] sm:$0xff]
        %v1763 = vld [vmem:[#allocation8 + $0x3b8] sm:$0xff]
        %v1764 = vld [vmem:[#allocation8 + $0x3c0] sm:$0xff]
        %v1765 = vld [vmem:[#allocation8 + $0x3c8] sm:$0xff]
        %v1766 = vld [vmem:[#allocation8 + $0x3d0] sm:$0xff]
        %v1767 = vld [vmem:[#allocation8 + $0x3d8] sm:$0xff]
        %v1768 = vld [vmem:[#allocation8 + $0x3e0] sm:$0xff]
        %v1769 = vld [vmem:[#allocation8 + $0x3e8] sm:$0xff]
        %v1770 = vld [vmem:[#allocation8 + $0x3f0] sm:$0xff]
        %v1771 = vld [vmem:[#allocation8 + $0x3f8] sm:$0xff]
        %v1772 = vld [vmem:[%s6] sm:$0xf]
        %v1774 = vlaneseq
        %v1775 = vshrl.u32 %v1774, 7
        %v1776 = vsub.s32 0, %v1775
        %v1777 = vrot.slane %v1772, %v1776
        %v1778 = vlaneseq
        %v1779 = vshrl.u32 %v1778, 7
        %v1780 = vsub.s32 1, %v1779
        %v1781 = vrot.slane %v1772, %v1780
        %v1782 = vlaneseq
        %v1783 = vshrl.u32 %v1782, 7
        %v1784 = vsub.s32 2, %v1783
        %v1785 = vrot.slane %v1772, %v1784
        %v1786 = vlaneseq
        %v1787 = vshrl.u32 %v1786, 7
        %v1788 = vsub.s32 3, %v1787
        %v1789 = vrot.slane %v1772, %v1788
        %1794 = vmatprep.subr.mxu0 %v1645
        %1795 = vmatpush1.msra.mxu0 %v1644
        %1796 = vmatprep.subr.mxu0 %v1649
        %1797 = vmatpush1.msra.mxu0 %v1648
        %1798 = vmatprep.subr.mxu0 %v1653
        %1799 = vmatpush1.msra.mxu0 %v1652
        %1800 = vmatprep.subr.mxu0 %v1657
        %1801 = vmatpush1.msra.mxu0 %v1656
        %1802 = vmatprep.subr.mxu0 %v1661
        %1803 = vmatpush1.msra.mxu0 %v1660
        %1804 = vmatprep.subr.mxu0 %v1665
        %1805 = vmatpush1.msra.mxu0 %v1664
        %1806 = vmatprep.subr.mxu0 %v1669
        %1807 = vmatpush1.msra.mxu0 %v1668
        %1808 = vmatprep.subr.mxu0 %v1673
        %1809 = vmatpush1.msra.mxu0 %v1672
        %1810 = vmatprep.subr.mxu0 %v1677
        %1811 = vmatpush1.msra.mxu0 %v1676
        %1812 = vmatprep.subr.mxu0 %v1681
        %1813 = vmatpush1.msra.mxu0 %v1680
        %1814 = vmatprep.subr.mxu0 %v1685
        %1815 = vmatpush1.msra.mxu0 %v1684
        %1816 = vmatprep.subr.mxu0 %v1689
        %1817 = vmatpush1.msra.mxu0 %v1688
        %1818 = vmatprep.subr.mxu0 %v1693
        %1819 = vmatpush1.msra.mxu0 %v1692
        %1820 = vmatprep.subr.mxu0 %v1697
        %1821 = vmatpush1.msra.mxu0 %v1696
        %1822 = vmatprep.subr.mxu0 %v1701
        %1823 = vmatpush1.msra.mxu0 %v1700
        %1824 = vmatprep.subr.mxu0 %v1705
        %1825 = vmatpush1.msra.mxu0 %v1704
        %1826 = vmatprep.subr.mxu0 %v1709
        %1827 = vmatpush1.msra.mxu0 %v1708
        %1828 = vmatprep.subr.mxu0 %v1713
        %1829 = vmatpush1.msra.mxu0 %v1712
        %1830 = vmatprep.subr.mxu0 %v1717
        %1831 = vmatpush1.msra.mxu0 %v1716
        %1832 = vmatprep.subr.mxu0 %v1721
        %1833 = vmatpush1.msra.mxu0 %v1720
        %1834 = vmatprep.subr.mxu0 %v1725
        %1835 = vmatpush1.msra.mxu0 %v1724
        %1836 = vmatprep.subr.mxu0 %v1729
        %1837 = vmatpush1.msra.mxu0 %v1728
        %1838 = vmatprep.subr.mxu0 %v1733
        %1839 = vmatpush1.msra.mxu0 %v1732
        %1840 = vmatprep.subr.mxu0 %v1737
        %1841 = vmatpush1.msra.mxu0 %v1736
        %1842 = vmatprep.subr.mxu0 %v1741
        %1843 = vmatpush1.msra.mxu0 %v1740
        %1844 = vmatprep.subr.mxu0 %v1745
        %1845 = vmatpush1.msra.mxu0 %v1744
        %1846 = vmatprep.subr.mxu0 %v1749
        %1847 = vmatpush1.msra.mxu0 %v1748
        %1848 = vmatprep.subr.mxu0 %v1753
        %1849 = vmatpush1.msra.mxu0 %v1752
        %1850 = vmatprep.subr.mxu0 %v1757
        %1851 = vmatpush1.msra.mxu0 %v1756
        %1852 = vmatprep.subr.mxu0 %v1761
        %1853 = vmatpush1.msra.mxu0 %v1760
        %1854 = vmatprep.subr.mxu0 %v1765
        %1855 = vmatpush1.msra.mxu0 %v1764
        %1856 = vmatprep.subr.mxu0 %v1769
        %1857 = vmatpush1.msra.mxu0 %v1768
        %1858 = vmatprep.mubr.f32.mxu0 %v1641
        %1859 = vmatmul.mubr.f32.gmra.mrb[0].mxu0 %v1640
        %v1860 = vpop.f32.mrb[0].mxu0
        %v1861 = vadd.f32 %v1777, %v1860
        %v1862 = vpop.f32.mrb[0].mxu0
        %v1863 = vadd.f32 %v1781, %v1862
        %1864 = vmatprep.mubr.f32.mxu0 %v1643
        %1865 = vmatmul.mubr.f32.gmra.mrb[0].mxu0 %v1642
        %v1866 = vpop.f32.mrb[0].mxu0
        %v1867 = vadd.f32 %v1777, %v1866
        %v1868 = vpop.f32.mrb[0].mxu0
        %v1869 = vadd.f32 %v1781, %v1868
        %1870 = vdwg.mxu0
        %1871 = vmatprep.subr.mxu0 %v1647
        %1872 = vmatpush1.msra.mxu0 %v1646
        %1873 = vmatprep.subr.mxu0 %v1651
        %1874 = vmatpush1.msra.mxu0 %v1650
        %1875 = vmatprep.subr.mxu0 %v1655
        %1876 = vmatpush1.msra.mxu0 %v1654
        %1877 = vmatprep.subr.mxu0 %v1659
        %1878 = vmatpush1.msra.mxu0 %v1658
        %1879 = vmatprep.subr.mxu0 %v1663
        %1880 = vmatpush1.msra.mxu0 %v1662
        %1881 = vmatprep.subr.mxu0 %v1667
        %1882 = vmatpush1.msra.mxu0 %v1666
        %1883 = vmatprep.subr.mxu0 %v1671
        %1884 = vmatpush1.msra.mxu0 %v1670
        %1885 = vmatprep.subr.mxu0 %v1675
        %1886 = vmatpush1.msra.mxu0 %v1674
        %1887 = vmatprep.subr.mxu0 %v1679
        %1888 = vmatpush1.msra.mxu0 %v1678
        %1889 = vmatprep.subr.mxu0 %v1683
        %1890 = vmatpush1.msra.mxu0 %v1682
        %1891 = vmatprep.subr.mxu0 %v1687
        %1892 = vmatpush1.msra.mxu0 %v1686
        %1893 = vmatprep.subr.mxu0 %v1691
        %1894 = vmatpush1.msra.mxu0 %v1690
        %1895 = vmatprep.subr.mxu0 %v1695
        %1896 = vmatpush1.msra.mxu0 %v1694
        %1897 = vmatprep.subr.mxu0 %v1699
        %1898 = vmatpush1.msra.mxu0 %v1698
        %1899 = vmatprep.subr.mxu0 %v1703
        %1900 = vmatpush1.msra.mxu0 %v1702
        %1901 = vmatprep.subr.mxu0 %v1707
        %1902 = vmatpush1.msra.mxu0 %v1706
        %1903 = vmatprep.subr.mxu0 %v1711
        %1904 = vmatpush1.msra.mxu0 %v1710
        %1905 = vmatprep.subr.mxu0 %v1715
        %1906 = vmatpush1.msra.mxu0 %v1714
        %1907 = vmatprep.subr.mxu0 %v1719
        %1908 = vmatpush1.msra.mxu0 %v1718
        %1909 = vmatprep.subr.mxu0 %v1723
        %1910 = vmatpush1.msra.mxu0 %v1722
        %1911 = vmatprep.subr.mxu0 %v1727
        %1912 = vmatpush1.msra.mxu0 %v1726
        %1913 = vmatprep.subr.mxu0 %v1731
        %1914 = vmatpush1.msra.mxu0 %v1730
        %1915 = vmatprep.subr.mxu0 %v1735
        %1916 = vmatpush1.msra.mxu0 %v1734
        %1917 = vmatprep.subr.mxu0 %v1739
        %1918 = vmatpush1.msra.mxu0 %v1738
        %1919 = vmatprep.subr.mxu0 %v1743
        %1920 = vmatpush1.msra.mxu0 %v1742
        %1921 = vmatprep.subr.mxu0 %v1747
        %1922 = vmatpush1.msra.mxu0 %v1746
        %1923 = vmatprep.subr.mxu0 %v1751
        %1924 = vmatpush1.msra.mxu0 %v1750
        %1925 = vmatprep.subr.mxu0 %v1755
        %1926 = vmatpush1.msra.mxu0 %v1754
        %1927 = vmatprep.subr.mxu0 %v1759
        %1928 = vmatpush1.msra.mxu0 %v1758
        %1929 = vmatprep.subr.mxu0 %v1763
        %1930 = vmatpush1.msra.mxu0 %v1762
        %1931 = vmatprep.subr.mxu0 %v1767
        %1932 = vmatpush1.msra.mxu0 %v1766
        %1933 = vmatprep.subr.mxu0 %v1771
        %1934 = vmatpush1.msra.mxu0 %v1770
        %1935 = vmatprep.mubr.f32.mxu0 %v1641
        %1936 = vmatmul.mubr.f32.gmra.mrb[0].mxu0 %v1640
        %v1937 = vpop.f32.mrb[0].mxu0
        %v1938 = vadd.f32 %v1785, %v1937
        %v1939 = vpop.f32.mrb[0].mxu0
        %v1940 = vadd.f32 %v1789, %v1939
        %1941 = vmatprep.mubr.f32.mxu0 %v1643
        %1942 = vmatmul.mubr.f32.gmra.mrb[0].mxu0 %v1642
        %v1943 = vpop.f32.mrb[0].mxu0
        %v1944 = vadd.f32 %v1785, %v1943
        %v1945 = vpop.f32.mrb[0].mxu0
        %v1946 = vadd.f32 %v1789, %v1945
        %1947 = vdwg.mxu0
        %v1948 = vmax.f32 %v1861, 0.0
        %v1949 = vmax.f32 %v1863, 0.0
        %v1950 = vmax.f32 %v1938, 0.0
        %v1951 = vmax.f32 %v1940, 0.0
        %v1952 = vmax.f32 %v1867, 0.0
        %v1953 = vmax.f32 %v1869, 0.0
        %v1954 = vmax.f32 %v1944, 0.0
        %v1955 = vmax.f32 %v1946, 0.0
        %v1956 = vld [vmem:[#allocation10] sm:$0xff]
        %v1957 = vld [vmem:[#allocation10 + $0x8] sm:$0xff]
        %v1958 = vld [vmem:[#allocation10 + $0x10] sm:$0xff]
        %v1959 = vld [vmem:[#allocation10 + $0x18] sm:$0xff]
        %v1960 = vld [vmem:[#allocation10 + $0x20] sm:$0xff]
        %v1961 = vld [vmem:[#allocation10 + $0x28] sm:$0xff]
        %v1962 = vld [vmem:[#allocation10 + $0x30] sm:$0xff]
        %v1963 = vld [vmem:[#allocation10 + $0x38] sm:$0xff]
        %v1964 = vld [vmem:[#allocation10 + $0x40] sm:$0xff]
        %v1965 = vld [vmem:[#allocation10 + $0x48] sm:$0xff]
        %v1966 = vld [vmem:[#allocation10 + $0x50] sm:$0xff]
        %v1967 = vld [vmem:[#allocation10 + $0x58] sm:$0xff]
        %v1968 = vld [vmem:[#allocation10 + $0x60] sm:$0xff]
        %v1969 = vld [vmem:[#allocation10 + $0x68] sm:$0xff]
        %v1970 = vld [vmem:[#allocation10 + $0x70] sm:$0xff]
        %v1971 = vld [vmem:[#allocation10 + $0x78] sm:$0xff]
        %v1972 = vld [vmem:[#allocation10 + $0x80] sm:$0xff]
        %v1973 = vld [vmem:[#allocation10 + $0x88] sm:$0xff]
        %v1974 = vld [vmem:[#allocation10 + $0x90] sm:$0xff]
        %v1975 = vld [vmem:[#allocation10 + $0x98] sm:$0xff]
        %v1976 = vld [vmem:[#allocation10 + $0xa0] sm:$0xff]
        %v1977 = vld [vmem:[#allocation10 + $0xa8] sm:$0xff]
        %v1978 = vld [vmem:[#allocation10 + $0xb0] sm:$0xff]
        %v1979 = vld [vmem:[#allocation10 + $0xb8] sm:$0xff]
        %v1980 = vld [vmem:[#allocation10 + $0xc0] sm:$0xff]
        %v1981 = vld [vmem:[#allocation10 + $0xc8] sm:$0xff]
        %v1982 = vld [vmem:[#allocation10 + $0xd0] sm:$0xff]
        %v1983 = vld [vmem:[#allocation10 + $0xd8] sm:$0xff]
        %v1984 = vld [vmem:[#allocation10 + $0xe0] sm:$0xff]
        %v1985 = vld [vmem:[#allocation10 + $0xe8] sm:$0xff]
        %v1986 = vld [vmem:[#allocation10 + $0xf0] sm:$0xff]
        %v1987 = vld [vmem:[#allocation10 + $0xf8] sm:$0xff]
        %v1988 = vld [vmem:[#allocation10 + $0x100] sm:$0xff]
        %v1989 = vld [vmem:[#allocation10 + $0x108] sm:$0xff]
        %v1990 = vld [vmem:[#allocation10 + $0x110] sm:$0xff]
        %v1991 = vld [vmem:[#allocation10 + $0x118] sm:$0xff]
        %v1992 = vld [vmem:[#allocation10 + $0x120] sm:$0xff]
        %v1993 = vld [vmem:[#allocation10 + $0x128] sm:$0xff]
        %v1994 = vld [vmem:[#allocation10 + $0x130] sm:$0xff]
        %v1995 = vld [vmem:[#allocation10 + $0x138] sm:$0xff]
        %v1996 = vld [vmem:[#allocation10 + $0x140] sm:$0xff]
        %v1997 = vld [vmem:[#allocation10 + $0x148] sm:$0xff]
        %v1998 = vld [vmem:[#allocation10 + $0x150] sm:$0xff]
        %v1999 = vld [vmem:[#allocation10 + $0x158] sm:$0xff]
        %v2000 = vld [vmem:[#allocation10 + $0x160] sm:$0xff]
        %v2001 = vld [vmem:[#allocation10 + $0x168] sm:$0xff]
        %v2002 = vld [vmem:[#allocation10 + $0x170] sm:$0xff]
        %v2003 = vld [vmem:[#allocation10 + $0x178] sm:$0xff]
        %v2004 = vld [vmem:[#allocation10 + $0x180] sm:$0xff]
        %v2005 = vld [vmem:[#allocation10 + $0x188] sm:$0xff]
        %v2006 = vld [vmem:[#allocation10 + $0x190] sm:$0xff]
        %v2007 = vld [vmem:[#allocation10 + $0x198] sm:$0xff]
        %v2008 = vld [vmem:[#allocation10 + $0x1a0] sm:$0xff]
        %v2009 = vld [vmem:[#allocation10 + $0x1a8] sm:$0xff]
        %v2010 = vld [vmem:[#allocation10 + $0x1b0] sm:$0xff]
        %v2011 = vld [vmem:[#allocation10 + $0x1b8] sm:$0xff]
        %v2012 = vld [vmem:[#allocation10 + $0x1c0] sm:$0xff]
        %v2013 = vld [vmem:[#allocation10 + $0x1c8] sm:$0xff]
        %v2014 = vld [vmem:[#allocation10 + $0x1d0] sm:$0xff]
        %v2015 = vld [vmem:[#allocation10 + $0x1d8] sm:$0xff]
        %v2016 = vld [vmem:[#allocation10 + $0x1e0] sm:$0xff]
        %v2017 = vld [vmem:[#allocation10 + $0x1e8] sm:$0xff]
        %v2018 = vld [vmem:[#allocation10 + $0x1f0] sm:$0xff]
        %v2019 = vld [vmem:[#allocation10 + $0x1f8] sm:$0xff]
        %v2020 = vld [vmem:[#allocation10 + $0x200] sm:$0xff]
        %v2021 = vld [vmem:[#allocation10 + $0x208] sm:$0xff]
        %v2022 = vld [vmem:[#allocation10 + $0x210] sm:$0xff]
        %v2023 = vld [vmem:[#allocation10 + $0x218] sm:$0xff]
        %v2024 = vld [vmem:[#allocation10 + $0x220] sm:$0xff]
        %v2025 = vld [vmem:[#allocation10 + $0x228] sm:$0xff]
        %v2026 = vld [vmem:[#allocation10 + $0x230] sm:$0xff]
        %v2027 = vld [vmem:[#allocation10 + $0x238] sm:$0xff]
        %v2028 = vld [vmem:[#allocation10 + $0x240] sm:$0xff]
        %v2029 = vld [vmem:[#allocation10 + $0x248] sm:$0xff]
        %v2030 = vld [vmem:[#allocation10 + $0x250] sm:$0xff]
        %v2031 = vld [vmem:[#allocation10 + $0x258] sm:$0xff]
        %v2032 = vld [vmem:[#allocation10 + $0x260] sm:$0xff]
        %v2033 = vld [vmem:[#allocation10 + $0x268] sm:$0xff]
        %v2034 = vld [vmem:[#allocation10 + $0x270] sm:$0xff]
        %v2035 = vld [vmem:[#allocation10 + $0x278] sm:$0xff]
        %v2036 = vld [vmem:[#allocation10 + $0x280] sm:$0xff]
        %v2037 = vld [vmem:[#allocation10 + $0x288] sm:$0xff]
        %v2038 = vld [vmem:[#allocation10 + $0x290] sm:$0xff]
        %v2039 = vld [vmem:[#allocation10 + $0x298] sm:$0xff]
        %v2040 = vld [vmem:[#allocation10 + $0x2a0] sm:$0xff]
        %v2041 = vld [vmem:[#allocation10 + $0x2a8] sm:$0xff]
        %v2042 = vld [vmem:[#allocation10 + $0x2b0] sm:$0xff]
        %v2043 = vld [vmem:[#allocation10 + $0x2b8] sm:$0xff]
        %v2044 = vld [vmem:[#allocation10 + $0x2c0] sm:$0xff]
        %v2045 = vld [vmem:[#allocation10 + $0x2c8] sm:$0xff]
        %v2046 = vld [vmem:[#allocation10 + $0x2d0] sm:$0xff]
        %v2047 = vld [vmem:[#allocation10 + $0x2d8] sm:$0xff]
        %v2048 = vld [vmem:[#allocation10 + $0x2e0] sm:$0xff]
        %v2049 = vld [vmem:[#allocation10 + $0x2e8] sm:$0xff]
        %v2050 = vld [vmem:[#allocation10 + $0x2f0] sm:$0xff]
        %v2051 = vld [vmem:[#allocation10 + $0x2f8] sm:$0xff]
        %v2052 = vld [vmem:[#allocation10 + $0x300] sm:$0xff]
        %v2053 = vld [vmem:[#allocation10 + $0x308] sm:$0xff]
        %v2054 = vld [vmem:[#allocation10 + $0x310] sm:$0xff]
        %v2055 = vld [vmem:[#allocation10 + $0x318] sm:$0xff]
        %v2056 = vld [vmem:[#allocation10 + $0x320] sm:$0xff]
        %v2057 = vld [vmem:[#allocation10 + $0x328] sm:$0xff]
        %v2058 = vld [vmem:[#allocation10 + $0x330] sm:$0xff]
        %v2059 = vld [vmem:[#allocation10 + $0x338] sm:$0xff]
        %v2060 = vld [vmem:[#allocation10 + $0x340] sm:$0xff]
        %v2061 = vld [vmem:[#allocation10 + $0x348] sm:$0xff]
        %v2062 = vld [vmem:[#allocation10 + $0x350] sm:$0xff]
        %v2063 = vld [vmem:[#allocation10 + $0x358] sm:$0xff]
        %v2064 = vld [vmem:[#allocation10 + $0x360] sm:$0xff]
        %v2065 = vld [vmem:[#allocation10 + $0x368] sm:$0xff]
        %v2066 = vld [vmem:[#allocation10 + $0x370] sm:$0xff]
        %v2067 = vld [vmem:[#allocation10 + $0x378] sm:$0xff]
        %v2068 = vld [vmem:[#allocation10 + $0x380] sm:$0xff]
        %v2069 = vld [vmem:[#allocation10 + $0x388] sm:$0xff]
        %v2070 = vld [vmem:[#allocation10 + $0x390] sm:$0xff]
        %v2071 = vld [vmem:[#allocation10 + $0x398] sm:$0xff]
        %v2072 = vld [vmem:[#allocation10 + $0x3a0] sm:$0xff]
        %v2073 = vld [vmem:[#allocation10 + $0x3a8] sm:$0xff]
        %v2074 = vld [vmem:[#allocation10 + $0x3b0] sm:$0xff]
        %v2075 = vld [vmem:[#allocation10 + $0x3b8] sm:$0xff]
        %v2076 = vld [vmem:[#allocation10 + $0x3c0] sm:$0xff]
        %v2077 = vld [vmem:[#allocation10 + $0x3c8] sm:$0xff]
        %v2078 = vld [vmem:[#allocation10 + $0x3d0] sm:$0xff]
        %v2079 = vld [vmem:[#allocation10 + $0x3d8] sm:$0xff]
        %v2080 = vld [vmem:[#allocation10 + $0x3e0] sm:$0xff]
        %v2081 = vld [vmem:[#allocation10 + $0x3e8] sm:$0xff]
        %v2082 = vld [vmem:[#allocation10 + $0x3f0] sm:$0xff]
        %v2083 = vld [vmem:[#allocation10 + $0x3f8] sm:$0xff]
        %v2084 = vld [vmem:[%s8] sm:$0x3]
        %v2086 = vlaneseq
        %v2087 = vshrl.u32 %v2086, 7
        %v2088 = vsub.s32 0, %v2087
        %v2089 = vrot.slane %v2084, %v2088
        %v2090 = vlaneseq
        %v2091 = vshrl.u32 %v2090, 7
        %v2092 = vsub.s32 1, %v2091
        %v2093 = vrot.slane %v2084, %v2092
        %2096 = vmatprep.subr.mxu0 %v1957
        %2097 = vmatpush1.msra.mxu0 %v1956
        %2098 = vmatprep.subr.mxu0 %v1959
        %2099 = vmatpush1.msra.mxu0 %v1958
        %2100 = vmatprep.subr.mxu0 %v1961
        %2101 = vmatpush1.msra.mxu0 %v1960
        %2102 = vmatprep.subr.mxu0 %v1963
        %2103 = vmatpush1.msra.mxu0 %v1962
        %2104 = vmatprep.subr.mxu0 %v1965
        %2105 = vmatpush1.msra.mxu0 %v1964
        %2106 = vmatprep.subr.mxu0 %v1967
        %2107 = vmatpush1.msra.mxu0 %v1966
        %2108 = vmatprep.subr.mxu0 %v1969
        %2109 = vmatpush1.msra.mxu0 %v1968
        %2110 = vmatprep.subr.mxu0 %v1971
        %2111 = vmatpush1.msra.mxu0 %v1970
        %2112 = vmatprep.subr.mxu0 %v1973
        %2113 = vmatpush1.msra.mxu0 %v1972
        %2114 = vmatprep.subr.mxu0 %v1975
        %2115 = vmatpush1.msra.mxu0 %v1974
        %2116 = vmatprep.subr.mxu0 %v1977
        %2117 = vmatpush1.msra.mxu0 %v1976
        %2118 = vmatprep.subr.mxu0 %v1979
        %2119 = vmatpush1.msra.mxu0 %v1978
        %2120 = vmatprep.subr.mxu0 %v1981
        %2121 = vmatpush1.msra.mxu0 %v1980
        %2122 = vmatprep.subr.mxu0 %v1983
        %2123 = vmatpush1.msra.mxu0 %v1982
        %2124 = vmatprep.subr.mxu0 %v1985
        %2125 = vmatpush1.msra.mxu0 %v1984
        %2126 = vmatprep.subr.mxu0 %v1987
        %2127 = vmatpush1.msra.mxu0 %v1986
        %2128 = vmatprep.subr.mxu0 %v1989
        %2129 = vmatpush1.msra.mxu0 %v1988
        %2130 = vmatprep.subr.mxu0 %v1991
        %2131 = vmatpush1.msra.mxu0 %v1990
        %2132 = vmatprep.subr.mxu0 %v1993
        %2133 = vmatpush1.msra.mxu0 %v1992
        %2134 = vmatprep.subr.mxu0 %v1995
        %2135 = vmatpush1.msra.mxu0 %v1994
        %2136 = vmatprep.subr.mxu0 %v1997
        %2137 = vmatpush1.msra.mxu0 %v1996
        %2138 = vmatprep.subr.mxu0 %v1999
        %2139 = vmatpush1.msra.mxu0 %v1998
        %2140 = vmatprep.subr.mxu0 %v2001
        %2141 = vmatpush1.msra.mxu0 %v2000
        %2142 = vmatprep.subr.mxu0 %v2003
        %2143 = vmatpush1.msra.mxu0 %v2002
        %2144 = vmatprep.subr.mxu0 %v2005
        %2145 = vmatpush1.msra.mxu0 %v2004
        %2146 = vmatprep.subr.mxu0 %v2007
        %2147 = vmatpush1.msra.mxu0 %v2006
        %2148 = vmatprep.subr.mxu0 %v2009
        %2149 = vmatpush1.msra.mxu0 %v2008
        %2150 = vmatprep.subr.mxu0 %v2011
        %2151 = vmatpush1.msra.mxu0 %v2010
        %2152 = vmatprep.subr.mxu0 %v2013
        %2153 = vmatpush1.msra.mxu0 %v2012
        %2154 = vmatprep.subr.mxu0 %v2015
        %2155 = vmatpush1.msra.mxu0 %v2014
        %2156 = vmatprep.subr.mxu0 %v2017
        %2157 = vmatpush1.msra.mxu0 %v2016
        %2158 = vmatprep.subr.mxu0 %v2019
        %2159 = vmatpush1.msra.mxu0 %v2018
        %2160 = vmatprep.mubr.f32.mxu0 %v1949
        %2161 = vmatmul.mubr.f32.gmra.mrb[0].mxu0 %v1948
        %v2162 = vpop.f32.mrb[0].mxu0
        %v2163 = vadd.f32 %v2089, %v2162
        %v2164 = vpop.f32.mrb[0].mxu0
        %v2165 = vadd.f32 %v2093, %v2164
        %2166 = vmatprep.mubr.f32.mxu0 %v1953
        %2167 = vmatmul.mubr.f32.gmra.mrb[0].mxu0 %v1952
        %v2168 = vpop.f32.mrb[0].mxu0
        %v2169 = vadd.f32 %v2089, %v2168
        %v2170 = vpop.f32.mrb[0].mxu0
        %v2171 = vadd.f32 %v2093, %v2170
        %2172 = vdwg.mxu0
        %2173 = vmatprep.subr.mxu0 %v2021
        %2174 = vmatpush1.msra.mxu0 %v2020
        %2175 = vmatprep.subr.mxu0 %v2023
        %2176 = vmatpush1.msra.mxu0 %v2022
        %2177 = vmatprep.subr.mxu0 %v2025
        %2178 = vmatpush1.msra.mxu0 %v2024
        %2179 = vmatprep.subr.mxu0 %v2027
        %2180 = vmatpush1.msra.mxu0 %v2026
        %2181 = vmatprep.subr.mxu0 %v2029
        %2182 = vmatpush1.msra.mxu0 %v2028
        %2183 = vmatprep.subr.mxu0 %v2031
        %2184 = vmatpush1.msra.mxu0 %v2030
        %2185 = vmatprep.subr.mxu0 %v2033
        %2186 = vmatpush1.msra.mxu0 %v2032
        %2187 = vmatprep.subr.mxu0 %v2035
        %2188 = vmatpush1.msra.mxu0 %v2034
        %2189 = vmatprep.subr.mxu0 %v2037
        %2190 = vmatpush1.msra.mxu0 %v2036
        %2191 = vmatprep.subr.mxu0 %v2039
        %2192 = vmatpush1.msra.mxu0 %v2038
        %2193 = vmatprep.subr.mxu0 %v2041
        %2194 = vmatpush1.msra.mxu0 %v2040
        %2195 = vmatprep.subr.mxu0 %v2043
        %2196 = vmatpush1.msra.mxu0 %v2042
        %2197 = vmatprep.subr.mxu0 %v2045
        %2198 = vmatpush1.msra.mxu0 %v2044
        %2199 = vmatprep.subr.mxu0 %v2047
        %2200 = vmatpush1.msra.mxu0 %v2046
        %2201 = vmatprep.subr.mxu0 %v2049
        %2202 = vmatpush1.msra.mxu0 %v2048
        %2203 = vmatprep.subr.mxu0 %v2051
        %2204 = vmatpush1.msra.mxu0 %v2050
        %2205 = vmatprep.subr.mxu0 %v2053
        %2206 = vmatpush1.msra.mxu0 %v2052
        %2207 = vmatprep.subr.mxu0 %v2055
        %2208 = vmatpush1.msra.mxu0 %v2054
        %2209 = vmatprep.subr.mxu0 %v2057
        %2210 = vmatpush1.msra.mxu0 %v2056
        %2211 = vmatprep.subr.mxu0 %v2059
        %2212 = vmatpush1.msra.mxu0 %v2058
        %2213 = vmatprep.subr.mxu0 %v2061
        %2214 = vmatpush1.msra.mxu0 %v2060
        %2215 = vmatprep.subr.mxu0 %v2063
        %2216 = vmatpush1.msra.mxu0 %v2062
        %2217 = vmatprep.subr.mxu0 %v2065
        %2218 = vmatpush1.msra.mxu0 %v2064
        %2219 = vmatprep.subr.mxu0 %v2067
        %2220 = vmatpush1.msra.mxu0 %v2066
        %2221 = vmatprep.subr.mxu0 %v2069
        %2222 = vmatpush1.msra.mxu0 %v2068
        %2223 = vmatprep.subr.mxu0 %v2071
        %2224 = vmatpush1.msra.mxu0 %v2070
        %2225 = vmatprep.subr.mxu0 %v2073
        %2226 = vmatpush1.msra.mxu0 %v2072
        %2227 = vmatprep.subr.mxu0 %v2075
        %2228 = vmatpush1.msra.mxu0 %v2074
        %2229 = vmatprep.subr.mxu0 %v2077
        %2230 = vmatpush1.msra.mxu0 %v2076
        %2231 = vmatprep.subr.mxu0 %v2079
        %2232 = vmatpush1.msra.mxu0 %v2078
        %2233 = vmatprep.subr.mxu0 %v2081
        %2234 = vmatpush1.msra.mxu0 %v2080
        %2235 = vmatprep.subr.mxu0 %v2083
        %2236 = vmatpush1.msra.mxu0 %v2082
        %2237 = vmatprep.mubr.f32.mxu0 %v1951
        %2238 = vmatmul.mubr.f32.gmra.mrb[0].mxu0 %v1950
        %v2239 = vpop.f32.mrb[0].mxu0
        %v2240 = vadd.f32 %v2163, %v2239
        %v2241 = vpop.f32.mrb[0].mxu0
        %v2242 = vadd.f32 %v2165, %v2241
        %2243 = vmatprep.mubr.f32.mxu0 %v1955
        %2244 = vmatmul.mubr.f32.gmra.mrb[0].mxu0 %v1954
        %v2245 = vpop.f32.mrb[0].mxu0
        %v2246 = vadd.f32 %v2169, %v2245
        %v2247 = vpop.f32.mrb[0].mxu0
        %v2248 = vadd.f32 %v2171, %v2247
        %2249 = vdwg.mxu0
        %v2250 = vadd.f32 %v1640, %v2240
        %v2251 = vadd.f32 %v1641, %v2242
        %v2252 = vadd.f32 %v1642, %v2246
        %v2253 = vadd.f32 %v1643, %v2248
        %v2254 = vld [vmem:[%s11] sm:$0x3]
        %v2255 = vld [vmem:[%s12] sm:$0x3]
        %v2256 = vadd.f32 %v2250, %v2251
        %2257 = vadd.xlane.f32.xlu0 %v2256
        %v2258 = vpop.xlane.xlu0 %2257
        %v2259 = vadd.f32 %v2252, %v2253
        %2260 = vadd.xlane.f32.xlu0 %v2259
        %v2261 = vpop.xlane.xlu0 %2260
        %v2262 = vmul.f32 %v2258, %v1587
        %v2263 = vmul.f32 %v2261, %v1587
        %v2264 = vsub.f32 %v2250, %v2262
        %v2265 = vsub.f32 %v2251, %v2262
        %v2266 = vsub.f32 %v2252, %v2263
        %v2267 = vsub.f32 %v2253, %v2263
        %v2268 = vmul.f32 %v2264, %v2264
        %v2269 = vmul.f32 %v2265, %v2265
        %v2270 = vmul.f32 %v2266, %v2266
        %v2271 = vmul.f32 %v2267, %v2267
        %v2272 = vadd.f32 %v2268, %v2269
        %2273 = vadd.xlane.f32.xlu0 %v2272
        %v2274 = vpop.xlane.xlu0 %2273
        %v2275 = vadd.f32 %v2270, %v2271
        %2276 = vadd.xlane.f32.xlu0 %v2275
        %v2277 = vpop.xlane.xlu0 %2276
        %v2278 = vmul.f32 %v2274, %v1587
        %v2279 = vmul.f32 %v2277, %v1587
        %v2280 = vadd.f32 %v2278, 1e-05
        %v2281 = vadd.f32 %v2279, 1e-05
        %v2282 = vrsqrt.pop %v2280
        %v2283 = vrsqrt.pop %v2281
        %v2284 = vmul.f32 %v2264, %v2282
        %v2285 = vmul.f32 %v2265, %v2282
        %v2286 = vmul.f32 %v2266, %v2283
        %v2287 = vmul.f32 %v2267, %v2283
        %v2289 = vlaneseq
        %v2290 = vshrl.u32 %v2289, 7
        %v2291 = vsub.s32 0, %v2290
        %v2292 = vrot.slane %v2254, %v2291
        %v2293 = vlaneseq
        %v2294 = vshrl.u32 %v2293, 7
        %v2295 = vsub.s32 1, %v2294
        %v2296 = vrot.slane %v2254, %v2295
        %v2299 = vmul.f32 %v2284, %v2292
        %v2300 = vmul.f32 %v2285, %v2296
        %v2301 = vmul.f32 %v2286, %v2292
        %v2302 = vmul.f32 %v2287, %v2296
        %v2304 = vlaneseq
        %v2305 = vshrl.u32 %v2304, 7
        %v2306 = vsub.s32 0, %v2305
        %v2307 = vrot.slane %v2255, %v2306
        %v2308 = vlaneseq
        %v2309 = vshrl.u32 %v2308, 7
        %v2310 = vsub.s32 1, %v2309
        %v2311 = vrot.slane %v2255, %v2310
        %v2314 = vadd.f32 %v2299, %v2307
        %v2315 = vadd.f32 %v2300, %v2311
        %v2316 = vadd.f32 %v2301, %v2307
        %v2317 = vadd.f32 %v2302, %v2311
        %2318 = vst [vmem:[%s516] sm:$0xff] %v2314
        %2319 = vst [vmem:[%s516 + $0x8] sm:$0xff] %v2315
        %2320 = vst [vmem:[%s516 + $0x10] sm:$0xff] %v2316
        %2321 = vst [vmem:[%s516 + $0x18] sm:$0xff] %v2317
        %s2322 = sand.u32 %s318, 1
        %s2323 = scalar_lea.sflag [#allocation4], %s2322
        %s2324 = sand.u32 %s318, 1
        %s2325 = smul.addr %s2324, 32
        %s2326 = scalar_lea.vmem [#allocation11], %s2325
        // Predicated region
        $region93: #{tpu_custom_call.1} parent=71 // pred_check
          %p2327 = pneg %p328
        $region94: #{tpu_custom_call.1} parent=71 // pred_check_branch
          %2329 = sbr.rel (%p2327) target = $region96
        $region95: #{tpu_custom_call.1} parent=71 // pred_region
          %s2331 = ssub.s32 512, 512
          %2332 = vsyncadd %s2323, %s2331
          %s2333 = smul.addr %s32, 4
          %s2334 = smul.addr %s2333, 128
          %s2335 = scalar_lea.hbm %s13, %s2334
          %s2336 = sshll.u32 %s2326, 4
          %s2337 = int_to_ptr.vmem [resolvable:$true] %s2336
          %2342 = dma.vmem_to_hbm [thread:$0]  %s2337, 512, %s2335, %s2323, 256, 256, 16
        $region96: #{tpu_custom_call.1} parent=71 // pred_fallthru
          _
      $region72: #{tpu_custom_call.1} parent=5 // pred_fallthru
        _
      %p2343 = scmp.le.s32.totalorder 2, %s27
      // Predicated region
      $region97: #{tpu_custom_call.1} parent=5 // pred_check
        %p2344 = pneg %p2343
      $region98: #{tpu_custom_call.1} parent=5 // pred_check_branch
        %2346 = sbr.rel (%p2344) target = $region100
      $region99: #{tpu_custom_call.1} parent=5 // pred_region
        %s2347 = ssub.s32 %s27, 2
        // Predicated region
        $region101: #{tpu_custom_call.1} parent=99 // pred_check
          %p2348 = pneg %p334
        $region102: #{tpu_custom_call.1} parent=99 // pred_check_branch
          %2350 = sbr.rel (%p2348) target = $region104
        $region103: #{tpu_custom_call.1} parent=99 // pred_region
          %s2351 = sand.u32 %s319, 1
          %s2352 = scalar_lea.sflag [#allocation4], %s2351
          %s2353 = sand.u32 %s319, 1
          %s2354 = smul.addr %s2353, 32
          %s2355 = scalar_lea.vmem [#allocation11], %s2354
          %2356 = dma.done %s2352, 512
        $region104: #{tpu_custom_call.1} parent=99 // pred_fallthru
          _
      $region100: #{tpu_custom_call.1} parent=5 // pred_fallthru
        _
    $region6: #{tpu_custom_call.1} parent=1 // loop_footer
      %s31 = sadd.s32 1, %s27
    $region7: #{tpu_custom_call.1} parent=1 // loop_footer_branch
      %26 = sbr.rel target = $region3
    $region8: #{tpu_custom_call.1} parent=1 // loop_exit
      _
    %2357 = vsyncpa [#allocation3], 1
    %s2358 = scalar_lea.sflag [#allocation3], 1
    %2359 = vsyncpa %s2358, 1
    %2360 = vsyncpa [#allocation6], 1
    %2361 = vsyncpa [#allocation9], 1
    %2362 = vsyncpa [#allocation4], 1
    %s2363 = scalar_lea.sflag [#allocation4], 1
    %2364 = vsyncpa %s2363, 1

</llo_original>
